<compile_context>
chip_gen: v7x
topology: tpu7x:2x2x1
jax: 0.10.0
libtpu: 0.0.40
codegen_flags: <defaults>
</compile_context>

<pallas_src>
import jax
import jax.numpy as jnp
from jax.experimental import pallas as pl
from jax.experimental.pallas import tpu as pltpu

_LANE = 128


def _round_up(x, m):
    return ((x + m - 1) // m) * m


def _pick_block_b(B, F, Dp, itemsize, vmem_budget_bytes=6 * 1024 * 1024):
    """Batch tile such that the double-buffered video block stays within a
    conservative VMEM budget (safe for v5e/v6e and v7x's smaller 64 MiB VMEM)."""
    per_row = 2 * F * Dp * itemsize          # double-buffered video bytes per batch row
    tb = (vmem_budget_bytes // max(per_row, 1)) // 8 * 8
    tb = int(max(8, min(tb, 512)))
    if B <= tb:
        return B                              # single full-extent block along B
    return tb


def _linear_cos_radius_kernel(text_ref, video_ref, wt_ref, bias_ref, out_ref):
    # text_ref : (TB, Dp)     video_ref: (TB, F, Dp)
    # wt_ref   : (F, Ep)      bias_ref : (1, Ep)       out_ref: (TB, Ep)
    t = text_ref[...].astype(jnp.float32)
    v = video_ref[...].astype(jnp.float32)

    # Fused-normalization cosine similarity:
    #   sims[b, f] = <t[b], v[b, f]> * rsqrt(|t[b]|^2) * rsqrt(|v[b, f]|^2)
    # Avoids materializing t_norm / v_norm; rsqrt lowers to the EUP slot.
    raw = jnp.sum(t[:, None, :] * v, axis=-1)              # (TB, F)
    tn2 = jnp.sum(t * t, axis=-1, keepdims=True)           # (TB, 1)
    vn2 = jnp.sum(v * v, axis=-1)                          # (TB, F)
    # NOTE: matches PyTorch's x / x.norm(): zero rows give inf/NaN, no epsilon.
    sims = raw * jax.lax.rsqrt(tn2) * jax.lax.rsqrt(vn2)   # (TB, F)

    wt = wt_ref[...].astype(jnp.float32)                   # (F, Ep)
    out = jnp.broadcast_to(bias_ref[...].astype(jnp.float32), out_ref.shape)

    num_frames = wt.shape[0]                                # static at trace time
    if num_frames >= 64:
        # Contraction deep enough that the MXU is worthwhile.
        out = out + jnp.dot(sims, wt, preferred_element_type=jnp.float32)
    else:
        # Tiny K (e.g. F=8): unrolled VPU broadcast-FMA, no MXU round trip.
        for f in range(num_frames):
            out = out + sims[:, f:f + 1] * wt[f:f + 1, :]

    out_ref[...] = out.astype(out_ref.dtype)


def prepare_linear_params(weight, bias):
    """Hoisted per-parameter-set prep (do once, not per call):
    weight (E, F), bias (E,) -> lane-dense padded Wt (F, Ep), bias (1, Ep)."""
    E, F = weight.shape
    Ep = _round_up(E, _LANE)
    wt_pad = jnp.pad(weight.T, ((0, 0), (0, Ep - E)))       # (F, Ep)
    bias_pad = jnp.pad(bias, (0, Ep - E)).reshape(1, Ep)    # (1, Ep)
    return wt_pad, bias_pad


def linear_cos_radius(text_embeds, video_embeds, wt_pad, bias_pad, embed_dim):
    """text_embeds (B, D), video_embeds (B, F, D), wt_pad (F, Ep), bias_pad (1, Ep)."""
    B, D = text_embeds.shape
    Bv, F, Dv = video_embeds.shape
    if B != Bv or D != Dv:
        raise ValueError(
            f"num_texts must equal num_vids and embed dims must match; got "
            f"text {text_embeds.shape} vs video {video_embeds.shape}")
    Fw, Ep = wt_pad.shape
    assert Fw == F, (Fw, F)

    # Zero-pad the lane / contraction axis D to 128 (norm- and dot-neutral).
    Dp = _round_up(D, _LANE)
    if Dp != D:
        text_embeds = jnp.pad(text_embeds, ((0, 0), (0, Dp - D)))
        video_embeds = jnp.pad(video_embeds, ((0, 0), (0, 0), (0, Dp - D)))

    itemsize = jnp.dtype(video_embeds.dtype).itemsize
    TB = _pick_block_b(B, F, Dp, itemsize)
    Bp = _round_up(B, TB)
    if Bp != B:
        text_embeds = jnp.pad(text_embeds, ((0, Bp - B), (0, 0)))
        video_embeds = jnp.pad(video_embeds, ((0, Bp - B), (0, 0), (0, 0)))
    n_b = Bp // TB

    out_pad = pl.pallas_call(
        _linear_cos_radius_kernel,
        out_shape=jax.ShapeDtypeStruct((Bp, Ep), jnp.float32),
        grid=(n_b,),
        in_specs=[
            pl.BlockSpec((TB, Dp), lambda i: (i, 0)),
            pl.BlockSpec((TB, F, Dp), lambda i: (i, 0, 0)),
            pl.BlockSpec((F, Ep), lambda i: (0, 0)),
            pl.BlockSpec((1, Ep), lambda i: (0, 0)),
        ],
        out_specs=pl.BlockSpec((TB, Ep), lambda i: (i, 0)),
        compiler_params=pltpu.CompilerParams(
            dimension_semantics=("parallel",)),
    )(text_embeds, video_embeds, wt_pad, bias_pad)

    return out_pad[:B, :embed_dim]


if __name__ == "__main__":
    # Config: num_frames=8, embed_dim=32, num_texts = num_vids = 2
    B, F, E = 2, 8, 32

    key = jax.random.PRNGKey(0)
    k_text, k_video = jax.random.split(key)
    text_embeds = jax.random.normal(k_text, (B, E), dtype=jnp.float32)
    video_embeds = jax.random.normal(k_video, (B, F, E), dtype=jnp.float32)

    # Parameter init mirroring _init_parameters(): eye_ weight, zero bias.
    weight = jnp.eye(E, F, dtype=jnp.float32)   # nn.Linear(F, E).weight shape (E, F)
    bias = jnp.zeros((E,), dtype=jnp.float32)

    wt_pad, bias_pad = prepare_linear_params(weight, bias)   # hoisted, once
    out = linear_cos_radius(text_embeds, video_embeds, wt_pad, bias_pad, E)
    out = jax.block_until_ready(out)

    # Pure-JAX reference (mirrors the PyTorch forward exactly).
    t = text_embeds / jnp.linalg.norm(text_embeds, axis=-1, keepdims=True)
    v = video_embeds / jnp.linalg.norm(video_embeds, axis=-1, keepdims=True)
    t_rep = jnp.repeat(t[:, None, :], F, axis=1)                       # (B, F, E)
    sims = jnp.einsum("bfd,bgd->bfg", t_rep, v)                        # (B, F, F)
    sims = jnp.mean(sims, axis=1)                                      # (B, F)
    ref = sims @ weight.T + bias                                       # (B, E)

    assert out.shape == (B, E), out.shape
    assert jnp.allclose(out, ref, atol=1e-5, rtol=1e-5), (
        f"max abs err {jnp.max(jnp.abs(out - ref))}"
    )
    print("KERNEL_OK")
</pallas_src>

<mosaic_0001>
module attributes {stable_mosaic.version = 11 : i64} {
  func.func @_linear_cos_radius_kernel(%arg0: i32, %arg1: memref<2x128xf32, #tpu.memory_space<vmem>>, %arg2: memref<2x8x128xf32, #tpu.memory_space<vmem>>, %arg3: memref<8x128xf32, #tpu.memory_space<vmem>>, %arg4: memref<1x128xf32, #tpu.memory_space<vmem>>, %arg5: memref<2x128xf32, #tpu.memory_space<vmem>>) attributes {dimension_semantics = [#tpu.dimension_semantics<parallel>], iteration_bounds = array<i64: 1>, scalar_prefetch = 0 : i64, scratch_operands = 0 : i64, tpu.core_type = #tpu.core_type<tc>, window_params = [{transform_indices = @transform_0, window_bounds = array<i64: 2, 128>}, {transform_indices = @transform_1, window_bounds = array<i64: 2, 8, 128>}, {pipeline_mode = #tpu.pipeline_mode<synchronous>, transform_indices = @transform_2, window_bounds = array<i64: 8, 128>}, {pipeline_mode = #tpu.pipeline_mode<synchronous>, transform_indices = @transform_3, window_bounds = array<i64: 1, 128>}, {transform_indices = @transform_4, window_bounds = array<i64: 2, 128>}]} {
    %c0 = arith.constant 0 : index
    %c0_0 = arith.constant 0 : index
    %0 = vector.load %arg1[%c0, %c0_0] : memref<2x128xf32, #tpu.memory_space<vmem>>, vector<2x128xf32>
    %c0_1 = arith.constant 0 : index
    %c0_2 = arith.constant 0 : index
    %c0_3 = arith.constant 0 : index
    %1 = vector.load %arg2[%c0_1, %c0_2, %c0_3] : memref<2x8x128xf32, #tpu.memory_space<vmem>>, vector<2x8x128xf32>
    %2 = vector.shape_cast %0 : vector<2x128xf32> to vector<2x1x128xf32>
    %3 = vector.broadcast %2 : vector<2x1x128xf32> to vector<2x8x128xf32>
    %4 = arith.mulf %3, %1 : vector<2x8x128xf32>
    %cst = arith.constant dense<0.000000e+00> : vector<2x8xf32>
    %5 = vector.multi_reduction <add>, %4, %cst [2] : vector<2x8x128xf32> to vector<2x8xf32>
    %6 = arith.mulf %0, %0 : vector<2x128xf32>
    %cst_4 = arith.constant dense<0.000000e+00> : vector<2xf32>
    %7 = vector.multi_reduction <add>, %6, %cst_4 [1] : vector<2x128xf32> to vector<2xf32>
    %8 = vector.shape_cast %7 : vector<2xf32> to vector<2x1xf32>
    %9 = arith.mulf %1, %1 : vector<2x8x128xf32>
    %cst_5 = arith.constant dense<0.000000e+00> : vector<2x8xf32>
    %10 = vector.multi_reduction <add>, %9, %cst_5 [2] : vector<2x8x128xf32> to vector<2x8xf32>
    %11 = math.rsqrt %8 : vector<2x1xf32>
    %12 = vector.broadcast %11 : vector<2x1xf32> to vector<2x8xf32>
    %13 = arith.mulf %5, %12 : vector<2x8xf32>
    %14 = math.rsqrt %10 : vector<2x8xf32>
    %15 = arith.mulf %13, %14 : vector<2x8xf32>
    %c0_6 = arith.constant 0 : index
    %c0_7 = arith.constant 0 : index
    %16 = vector.load %arg3[%c0_6, %c0_7] : memref<8x128xf32, #tpu.memory_space<vmem>>, vector<8x128xf32>
    %c0_8 = arith.constant 0 : index
    %c0_9 = arith.constant 0 : index
    %17 = vector.load %arg4[%c0_8, %c0_9] : memref<1x128xf32, #tpu.memory_space<vmem>>, vector<1x128xf32>
    %18 = vector.shape_cast %17 : vector<1x128xf32> to vector<1x128xf32>
    %19 = vector.broadcast %18 : vector<1x128xf32> to vector<2x128xf32>
    %20 = vector.extract_strided_slice %15 {offsets = [0, 0], sizes = [2, 1], strides = [1, 1]} : vector<2x8xf32> to vector<2x1xf32>
    %21 = vector.extract_strided_slice %16 {offsets = [0, 0], sizes = [1, 128], strides = [1, 1]} : vector<8x128xf32> to vector<1x128xf32>
    %22 = vector.broadcast %20 : vector<2x1xf32> to vector<2x128xf32>
    %23 = vector.broadcast %21 : vector<1x128xf32> to vector<2x128xf32>
    %24 = arith.mulf %22, %23 : vector<2x128xf32>
    %25 = arith.addf %19, %24 : vector<2x128xf32>
    %26 = vector.extract_strided_slice %15 {offsets = [0, 1], sizes = [2, 1], strides = [1, 1]} : vector<2x8xf32> to vector<2x1xf32>
    %27 = vector.extract_strided_slice %16 {offsets = [1, 0], sizes = [1, 128], strides = [1, 1]} : vector<8x128xf32> to vector<1x128xf32>
    %28 = vector.broadcast %26 : vector<2x1xf32> to vector<2x128xf32>
    %29 = vector.broadcast %27 : vector<1x128xf32> to vector<2x128xf32>
    %30 = arith.mulf %28, %29 : vector<2x128xf32>
    %31 = arith.addf %25, %30 : vector<2x128xf32>
    %32 = vector.extract_strided_slice %15 {offsets = [0, 2], sizes = [2, 1], strides = [1, 1]} : vector<2x8xf32> to vector<2x1xf32>
    %33 = vector.extract_strided_slice %16 {offsets = [2, 0], sizes = [1, 128], strides = [1, 1]} : vector<8x128xf32> to vector<1x128xf32>
    %34 = vector.broadcast %32 : vector<2x1xf32> to vector<2x128xf32>
    %35 = vector.broadcast %33 : vector<1x128xf32> to vector<2x128xf32>
    %36 = arith.mulf %34, %35 : vector<2x128xf32>
    %37 = arith.addf %31, %36 : vector<2x128xf32>
    %38 = vector.extract_strided_slice %15 {offsets = [0, 3], sizes = [2, 1], strides = [1, 1]} : vector<2x8xf32> to vector<2x1xf32>
    %39 = vector.extract_strided_slice %16 {offsets = [3, 0], sizes = [1, 128], strides = [1, 1]} : vector<8x128xf32> to vector<1x128xf32>
    %40 = vector.broadcast %38 : vector<2x1xf32> to vector<2x128xf32>
    %41 = vector.broadcast %39 : vector<1x128xf32> to vector<2x128xf32>
    %42 = arith.mulf %40, %41 : vector<2x128xf32>
    %43 = arith.addf %37, %42 : vector<2x128xf32>
    %44 = vector.extract_strided_slice %15 {offsets = [0, 4], sizes = [2, 1], strides = [1, 1]} : vector<2x8xf32> to vector<2x1xf32>
    %45 = vector.extract_strided_slice %16 {offsets = [4, 0], sizes = [1, 128], strides = [1, 1]} : vector<8x128xf32> to vector<1x128xf32>
    %46 = vector.broadcast %44 : vector<2x1xf32> to vector<2x128xf32>
    %47 = vector.broadcast %45 : vector<1x128xf32> to vector<2x128xf32>
    %48 = arith.mulf %46, %47 : vector<2x128xf32>
    %49 = arith.addf %43, %48 : vector<2x128xf32>
    %50 = vector.extract_strided_slice %15 {offsets = [0, 5], sizes = [2, 1], strides = [1, 1]} : vector<2x8xf32> to vector<2x1xf32>
    %51 = vector.extract_strided_slice %16 {offsets = [5, 0], sizes = [1, 128], strides = [1, 1]} : vector<8x128xf32> to vector<1x128xf32>
    %52 = vector.broadcast %50 : vector<2x1xf32> to vector<2x128xf32>
    %53 = vector.broadcast %51 : vector<1x128xf32> to vector<2x128xf32>
    %54 = arith.mulf %52, %53 : vector<2x128xf32>
    %55 = arith.addf %49, %54 : vector<2x128xf32>
    %56 = vector.extract_strided_slice %15 {offsets = [0, 6], sizes = [2, 1], strides = [1, 1]} : vector<2x8xf32> to vector<2x1xf32>
    %57 = vector.extract_strided_slice %16 {offsets = [6, 0], sizes = [1, 128], strides = [1, 1]} : vector<8x128xf32> to vector<1x128xf32>
    %58 = vector.broadcast %56 : vector<2x1xf32> to vector<2x128xf32>
    %59 = vector.broadcast %57 : vector<1x128xf32> to vector<2x128xf32>
    %60 = arith.mulf %58, %59 : vector<2x128xf32>
    %61 = arith.addf %55, %60 : vector<2x128xf32>
    %62 = vector.extract_strided_slice %15 {offsets = [0, 7], sizes = [2, 1], strides = [1, 1]} : vector<2x8xf32> to vector<2x1xf32>
    %63 = vector.extract_strided_slice %16 {offsets = [7, 0], sizes = [1, 128], strides = [1, 1]} : vector<8x128xf32> to vector<1x128xf32>
    %64 = vector.broadcast %62 : vector<2x1xf32> to vector<2x128xf32>
    %65 = vector.broadcast %63 : vector<1x128xf32> to vector<2x128xf32>
    %66 = arith.mulf %64, %65 : vector<2x128xf32>
    %67 = arith.addf %61, %66 : vector<2x128xf32>
    %c0_10 = arith.constant 0 : index
    %c0_11 = arith.constant 0 : index
    %68 = vector.load %arg5[%c0_10, %c0_11] : memref<2x128xf32, #tpu.memory_space<vmem>>, vector<2x128xf32>
    tpu.vector_store %arg5[%c0_10, %c0_11], %67 {strides = array<i32>} : memref<2x128xf32, #tpu.memory_space<vmem>>, vector<2x128xf32>,
    return
  }
  func.func @transform_0(%arg0: i32) -> (i32, i32) {
    %c0_i32 = arith.constant 0 : i32
    %c0_i32_0 = arith.constant 0 : i32
    return %arg0, %c0_i32 : i32, i32
  }
  func.func @transform_1(%arg0: i32) -> (i32, i32, i32) {
    %c0_i32 = arith.constant 0 : i32
    %c0_i32_0 = arith.constant 0 : i32
    %c0_i32_1 = arith.constant 0 : i32
    return %arg0, %c0_i32, %c0_i32_0 : i32, i32, i32
  }
  func.func @transform_2(%arg0: i32) -> (i32, i32) {
    %c0_i32 = arith.constant 0 : i32
    %c0_i32_0 = arith.constant 0 : i32
    %c0_i32_1 = arith.constant 0 : i32
    return %c0_i32, %c0_i32_0 : i32, i32
  }
  func.func @transform_3(%arg0: i32) -> (i32, i32) {
    %c0_i32 = arith.constant 0 : i32
    %c0_i32_0 = arith.constant 0 : i32
    %c0_i32_1 = arith.constant 0 : i32
    return %c0_i32, %c0_i32_0 : i32, i32
  }
  func.func @transform_4(%arg0: i32) -> (i32, i32) {
    %c0_i32 = arith.constant 0 : i32
    %c0_i32_0 = arith.constant 0 : i32
    return %arg0, %c0_i32 : i32, i32
  }
}

</mosaic_0001>

<llo_original>
// kernel: tpu_custom_call.1
$region0: #{tpu_custom_call.1}
  #allocation0 [shape = 'u32[]', space=smem, size = 0x4, offset = 0x4, fixed_abs, tag = 'smem constant byte address 0x4 - core index']
  #allocation1 [shape = 'u32[144,128]{1,0:T(1,128)}', space=vmem, size = 0x12000, scoped, tag = 'internal scratch']
  %s0 = inlined_call_operand.hbm [shape: f32[2,128], index: 0, kind: input, shape index: {}]
  %s1 = inlined_call_operand.hbm [shape: f32[2,8,128], index: 1, kind: input, shape index: {}]
  %s2 = inlined_call_operand.hbm [shape: f32[8,128], index: 2, kind: input, shape index: {}]
  %s3 = inlined_call_operand.vmem [shape: f32[1,128], index: 3, kind: input, shape index: {}]
  %s4 = inlined_call_operand.hbm [shape: f32[2,128], index: 4, kind: output, shape index: {}]
  %s5 = sld [smem:[#allocation0]]
  $region38: #{tpu_custom_call.1} parent=0
    _
  %s7 = ssub.s32 1, %s5
  %s8 = scalar_select 0, %s7, %s5
  $region1: #{tpu_custom_call.1} parent=0
    #allocation2 [shape = 'u8[1024]{0}', space=vmem, size = 0x400, scoped, tag = 'input window, operand 0, single buffered']
    #allocation3 [shape = 's32[1]{0}', space=sflag, size = 0x4, scoped, tag = 'scoped memory for tpu_custom_call.1']
    #allocation4 [shape = 's32[1]{0}', space=sflag, size = 0x4, scoped, tag = 'scoped memory for tpu_custom_call.1']
    #allocation5 [shape = 'u8[8192]{0}', space=vmem, size = 0x2000, scoped, tag = 'input window, operand 1, single buffered']
    #allocation6 [shape = 's32[1]{0}', space=sflag, size = 0x4, scoped, tag = 'scoped memory for tpu_custom_call.1']
    #allocation7 [shape = 'u8[4096]{0}', space=vmem, size = 0x1000, scoped, tag = 'input window, operand 2, single buffered']
    #allocation8 [shape = 'u8[1024]{0}', space=vmem, size = 0x400, scoped, tag = 'output window, operand 0, single buffered']
    %9 = vsyncpa [#allocation3], 0
    %10 = vsyncpa [#allocation6], 0
    %11 = vsyncpa [#allocation4], 0
    // Predicated region
    $region2: #{tpu_custom_call.1} parent=1 // pred_check
      _
    $region3: #{tpu_custom_call.1} parent=1 // pred_check_branch
      %13 = sbr.rel (0) target = $region5
    $region4: #{tpu_custom_call.1} parent=1 // pred_region
      %s15 = ssub.s32 32, 32
      %16 = vsyncadd [#allocation3], %s15
      %s18 = sshll.u32 [#allocation2], 4
      %s19 = int_to_ptr.vmem [resolvable:$true] %s18
      %21 = dma.hbm_to_vmem [thread:$0]  %s0, 32, %s19, [#allocation3]
    $region5: #{tpu_custom_call.1} parent=1 // pred_fallthru
      _
    // Predicated region
    $region6: #{tpu_custom_call.1} parent=1 // pred_check
      _
    $region7: #{tpu_custom_call.1} parent=1 // pred_check_branch
      %23 = sbr.rel (0) target = $region9
    $region8: #{tpu_custom_call.1} parent=1 // pred_region
      %s25 = ssub.s32 256, 256
      %26 = vsyncadd [#allocation6], %s25
      %s27 = sshll.u32 [#allocation5], 4
      %s28 = int_to_ptr.vmem [resolvable:$true] %s27
      %33 = dma.hbm_to_vmem [thread:$0]  %s1, 256, %s28, [#allocation6], 128, 128, 8
    $region9: #{tpu_custom_call.1} parent=1 // pred_fallthru
      _
    // Predicated region
    $region10: #{tpu_custom_call.1} parent=1 // pred_check
      _
    $region11: #{tpu_custom_call.1} parent=1 // pred_check_branch
      %35 = sbr.rel (0) target = $region13
    $region12: #{tpu_custom_call.1} parent=1 // pred_region
      %s37 = ssub.s32 128, 128
      %38 = vsyncadd [#allocation6], %s37
      %s40 = sshll.u32 [#allocation7], 4
      %s41 = int_to_ptr.vmem [resolvable:$true] %s40
      %43 = dma.hbm_to_vmem [thread:$0]  %s2, 128, %s41, [#allocation6]
    $region13: #{tpu_custom_call.1} parent=1 // pred_fallthru
      _
    // Predicated region
    $region14: #{tpu_custom_call.1} parent=1 // pred_check
      _
    $region15: #{tpu_custom_call.1} parent=1 // pred_check_branch
      %45 = sbr.rel (0) target = $region17
    $region16: #{tpu_custom_call.1} parent=1 // pred_region
      _
    $region17: #{tpu_custom_call.1} parent=1 // pred_fallthru
      _
    // Predicated region
    $region18: #{tpu_custom_call.1} parent=1 // pred_check
      _
    $region19: #{tpu_custom_call.1} parent=1 // pred_check_branch
      %47 = sbr.rel (0) target = $region21
    $region20: #{tpu_custom_call.1} parent=1 // pred_region
      %48 = dma.done [#allocation3], 32
    $region21: #{tpu_custom_call.1} parent=1 // pred_fallthru
      _
    // Predicated region
    $region22: #{tpu_custom_call.1} parent=1 // pred_check
      _
    $region23: #{tpu_custom_call.1} parent=1 // pred_check_branch
      %50 = sbr.rel (0) target = $region25
    $region24: #{tpu_custom_call.1} parent=1 // pred_region
      %51 = dma.done [#allocation6], 256
    $region25: #{tpu_custom_call.1} parent=1 // pred_fallthru
      _
    // Predicated region
    $region26: #{tpu_custom_call.1} parent=1 // pred_check
      _
    $region27: #{tpu_custom_call.1} parent=1 // pred_check_branch
      %53 = sbr.rel (0) target = $region29
    $region28: #{tpu_custom_call.1} parent=1 // pred_region
      %54 = dma.done [#allocation6], 128
    $region29: #{tpu_custom_call.1} parent=1 // pred_fallthru
      _
    %v55 = vld [vmem:[#allocation2] sm:$0x3]
    %v56 = vld [vmem:[#allocation5] sm:$0xff]
    %v57 = vld [vmem:[#allocation5 + $0x8] sm:$0xff]
    %v60 = vunpack.c.l.s4 1966171168
    %v61 = vunpack.c.0.s8 %v60
    %v62 = vlaneseq
    %v63 = vshrl.u32 %v62, 7
    %v64 = vsub.s32 %v61, %v63
    %v65 = vrot.slane %v55, %v64
    %v66 = vcombine.high %v65, %v65
    %v68 = vunpack.c.l.s4 1966171168
    %v69 = vunpack.c.0.s8 %v68
    %v70 = vlaneseq
    %v71 = vshrl.u32 %v70, 7
    %v72 = vsub.s32 %v69, %v71
    %v73 = vrot.slane %v65, %v72
    %v75 = vunpack.c.l.s4 1966171168
    %v76 = vunpack.c.0.s8 %v75
    %v77 = vlaneseq
    %v78 = vshrl.u32 %v77, 7
    %v79 = vsub.s32 %v76, %v78
    %v80 = vrot.slane %v66, %v79
    %v81 = vlaneseq
    %v82 = vshrl.u32 %v81, 7
    %v83 = vsub.s32 0, %v82
    %v84 = vrot.slane %v73, %v83
    %v85 = vlaneseq
    %v86 = vshrl.u32 %v85, 7
    %v87 = vsub.s32 0, %v86
    %v88 = vrot.slane %v80, %v87
    %v91 = vmul.f32 %v84, %v56
    %v92 = vmul.f32 %v88, %v57
    %93 = vadd.xlane.f32.xlu0 %v91
    %v94 = vpop.xlane.xlu0 %93
    %95 = vadd.xlane.f32.xlu0 %v92
    %v96 = vpop.xlane.xlu0 %95
    %v97 = vmul.f32 %v55, %v55
    %vm98 = vcmask 1041408
    %v99 = vsel %vm98, %v97, 0.0
    %100 = vadd.xlane.f32.xlu0 %v99
    %v101 = vpop.xlane.xlu0 %100
    %v102 = vmul.f32 %v56, %v56
    %v103 = vmul.f32 %v57, %v57
    %104 = vadd.xlane.f32.xlu0 %v102
    %v105 = vpop.xlane.xlu0 %104
    %106 = vadd.xlane.f32.xlu0 %v103
    %v107 = vpop.xlane.xlu0 %106
    %v108 = vrsqrt.pop %v101
    %v110 = vlaneseq
    %v111 = vshrl.u32 %v110, 7
    %v112 = vsub.s32 0, %v111
    %v113 = vrot.slane %v108, %v112
    %v114 = vlaneseq
    %v115 = vshrl.u32 %v114, 7
    %v116 = vsub.s32 1, %v115
    %v117 = vrot.slane %v108, %v116
    %v120 = vmul.f32 %v94, %v113
    %v121 = vmul.f32 %v96, %v117
    %v122 = vrsqrt.pop %v105
    %v123 = vrsqrt.pop %v107
    %v124 = vmul.f32 %v120, %v122
    %v125 = vmul.f32 %v121, %v123
    %v126 = vld [vmem:[#allocation7] sm:$0xff]
    %v127 = vld [vmem:[%s3] sm:$0x1]
    %v129 = vlaneseq
    %v130 = vshrl.u32 %v129, 7
    %v131 = vsub.s32 0, %v130
    %v132 = vrot.slane %v127, %v131
    %v134 = vlaneseq
    %v135 = vshrl.u32 %v134, 7
    %v136 = vsub.s32 0, %v135
    %v137 = vrot.slane %v124, %v136
    %v138 = vlaneseq
    %v139 = vshrl.u32 %v138, 7
    %v140 = vsub.s32 0, %v139
    %v141 = vrot.slane %v125, %v140
    %v142 = vlaneseq
    %v143 = vshrl.u32 %v142, 7
    %v144 = vsub.s32 0, %v143
    %v145 = vrot.slane %v126, %v144
    %148 = vbcast.lane.b32.xlu0 %v145, 256
    %v149 = vpop.permute.xlu0 %148
    %s151 = sor.u32 256, 8
    %152 = vbcast.lane.b32.xlu0 %v145, %s151
    %v153 = vpop.permute.xlu0 %152
    %s155 = sor.u32 256, 16
    %156 = vbcast.lane.b32.xlu0 %v145, %s155
    %v157 = vpop.permute.xlu0 %156
    %s159 = sor.u32 256, 24
    %160 = vbcast.lane.b32.xlu0 %v145, %s159
    %v161 = vpop.permute.xlu0 %160
    %s163 = sor.u32 256, 32
    %164 = vbcast.lane.b32.xlu0 %v145, %s163
    %v165 = vpop.permute.xlu0 %164
    %s167 = sor.u32 256, 40
    %168 = vbcast.lane.b32.xlu0 %v145, %s167
    %v169 = vpop.permute.xlu0 %168
    %s171 = sor.u32 256, 48
    %172 = vbcast.lane.b32.xlu0 %v145, %s171
    %v173 = vpop.permute.xlu0 %172
    %s175 = sor.u32 256, 56
    %176 = vbcast.lane.b32.xlu0 %v145, %s175
    %v177 = vpop.permute.xlu0 %176
    %s179 = sor.u32 256, 64
    %180 = vbcast.lane.b32.xlu0 %v145, %s179
    %v181 = vpop.permute.xlu0 %180
    %s183 = sor.u32 256, 72
    %184 = vbcast.lane.b32.xlu0 %v145, %s183
    %v185 = vpop.permute.xlu0 %184
    %s187 = sor.u32 256, 80
    %188 = vbcast.lane.b32.xlu0 %v145, %s187
    %v189 = vpop.permute.xlu0 %188
    %s191 = sor.u32 256, 88
    %192 = vbcast.lane.b32.xlu0 %v145, %s191
    %v193 = vpop.permute.xlu0 %192
    %s195 = sor.u32 256, 96
    %196 = vbcast.lane.b32.xlu0 %v145, %s195
    %v197 = vpop.permute.xlu0 %196
    %s199 = sor.u32 256, 104
    %200 = vbcast.lane.b32.xlu0 %v145, %s199
    %v201 = vpop.permute.xlu0 %200
    %s203 = sor.u32 256, 112
    %204 = vbcast.lane.b32.xlu0 %v145, %s203
    %v205 = vpop.permute.xlu0 %204
    %s207 = sor.u32 256, 120
    %208 = vbcast.lane.b32.xlu0 %v145, %s207
    %v209 = vpop.permute.xlu0 %208
    %v226 = vmul.f32 %v137, %v149
    %v227 = vmul.f32 %v137, %v153
    %v228 = vmul.f32 %v137, %v157
    %v229 = vmul.f32 %v137, %v161
    %v230 = vmul.f32 %v137, %v165
    %v231 = vmul.f32 %v137, %v169
    %v232 = vmul.f32 %v137, %v173
    %v233 = vmul.f32 %v137, %v177
    %v234 = vmul.f32 %v137, %v181
    %v235 = vmul.f32 %v137, %v185
    %v236 = vmul.f32 %v137, %v189
    %v237 = vmul.f32 %v137, %v193
    %v238 = vmul.f32 %v137, %v197
    %v239 = vmul.f32 %v137, %v201
    %v240 = vmul.f32 %v137, %v205
    %v241 = vmul.f32 %v137, %v209
    %v242 = vmul.f32 %v141, %v149
    %v243 = vmul.f32 %v141, %v153
    %v244 = vmul.f32 %v141, %v157
    %v245 = vmul.f32 %v141, %v161
    %v246 = vmul.f32 %v141, %v165
    %v247 = vmul.f32 %v141, %v169
    %v248 = vmul.f32 %v141, %v173
    %v249 = vmul.f32 %v141, %v177
    %v250 = vmul.f32 %v141, %v181
    %v251 = vmul.f32 %v141, %v185
    %v252 = vmul.f32 %v141, %v189
    %v253 = vmul.f32 %v141, %v193
    %v254 = vmul.f32 %v141, %v197
    %v255 = vmul.f32 %v141, %v201
    %v256 = vmul.f32 %v141, %v205
    %v257 = vmul.f32 %v141, %v209
    %290 = vset.pattern.permute.xlu0 0
    %291 = vperm.xlu0 %290, %v226
    %v292 = vpop.permute.xlu0 %291
    %293 = vset.pattern.permute.xlu0 0
    %294 = vperm.xlu0 %293, %v227
    %v295 = vpop.permute.xlu0 %294
    %296 = vset.pattern.permute.xlu0 0
    %297 = vperm.xlu0 %296, %v228
    %v298 = vpop.permute.xlu0 %297
    %299 = vset.pattern.permute.xlu0 0
    %300 = vperm.xlu0 %299, %v229
    %v301 = vpop.permute.xlu0 %300
    %302 = vset.pattern.permute.xlu0 0
    %303 = vperm.xlu0 %302, %v230
    %v304 = vpop.permute.xlu0 %303
    %305 = vset.pattern.permute.xlu0 0
    %306 = vperm.xlu0 %305, %v231
    %v307 = vpop.permute.xlu0 %306
    %308 = vset.pattern.permute.xlu0 0
    %309 = vperm.xlu0 %308, %v232
    %v310 = vpop.permute.xlu0 %309
    %311 = vset.pattern.permute.xlu0 0
    %312 = vperm.xlu0 %311, %v233
    %v313 = vpop.permute.xlu0 %312
    %314 = vset.pattern.permute.xlu0 0
    %315 = vperm.xlu0 %314, %v234
    %v316 = vpop.permute.xlu0 %315
    %317 = vset.pattern.permute.xlu0 0
    %318 = vperm.xlu0 %317, %v235
    %v319 = vpop.permute.xlu0 %318
    %320 = vset.pattern.permute.xlu0 0
    %321 = vperm.xlu0 %320, %v236
    %v322 = vpop.permute.xlu0 %321
    %323 = vset.pattern.permute.xlu0 0
    %324 = vperm.xlu0 %323, %v237
    %v325 = vpop.permute.xlu0 %324
    %326 = vset.pattern.permute.xlu0 0
    %327 = vperm.xlu0 %326, %v238
    %v328 = vpop.permute.xlu0 %327
    %329 = vset.pattern.permute.xlu0 0
    %330 = vperm.xlu0 %329, %v239
    %v331 = vpop.permute.xlu0 %330
    %332 = vset.pattern.permute.xlu0 0
    %333 = vperm.xlu0 %332, %v240
    %v334 = vpop.permute.xlu0 %333
    %335 = vset.pattern.permute.xlu0 0
    %336 = vperm.xlu0 %335, %v241
    %v337 = vpop.permute.xlu0 %336
    %338 = vset.pattern.permute.xlu0 0
    %339 = vperm.xlu0 %338, %v242
    %v340 = vpop.permute.xlu0 %339
    %341 = vset.pattern.permute.xlu0 0
    %342 = vperm.xlu0 %341, %v243
    %v343 = vpop.permute.xlu0 %342
    %344 = vset.pattern.permute.xlu0 0
    %345 = vperm.xlu0 %344, %v244
    %v346 = vpop.permute.xlu0 %345
    %347 = vset.pattern.permute.xlu0 0
    %348 = vperm.xlu0 %347, %v245
    %v349 = vpop.permute.xlu0 %348
    %350 = vset.pattern.permute.xlu0 0
    %351 = vperm.xlu0 %350, %v246
    %v352 = vpop.permute.xlu0 %351
    %353 = vset.pattern.permute.xlu0 0
    %354 = vperm.xlu0 %353, %v247
    %v355 = vpop.permute.xlu0 %354
    %356 = vset.pattern.permute.xlu0 0
    %357 = vperm.xlu0 %356, %v248
    %v358 = vpop.permute.xlu0 %357
    %359 = vset.pattern.permute.xlu0 0
    %360 = vperm.xlu0 %359, %v249
    %v361 = vpop.permute.xlu0 %360
    %362 = vset.pattern.permute.xlu0 0
    %363 = vperm.xlu0 %362, %v250
    %v364 = vpop.permute.xlu0 %363
    %365 = vset.pattern.permute.xlu0 0
    %366 = vperm.xlu0 %365, %v251
    %v367 = vpop.permute.xlu0 %366
    %368 = vset.pattern.permute.xlu0 0
    %369 = vperm.xlu0 %368, %v252
    %v370 = vpop.permute.xlu0 %369
    %371 = vset.pattern.permute.xlu0 0
    %372 = vperm.xlu0 %371, %v253
    %v373 = vpop.permute.xlu0 %372
    %374 = vset.pattern.permute.xlu0 0
    %375 = vperm.xlu0 %374, %v254
    %v376 = vpop.permute.xlu0 %375
    %377 = vset.pattern.permute.xlu0 0
    %378 = vperm.xlu0 %377, %v255
    %v379 = vpop.permute.xlu0 %378
    %380 = vset.pattern.permute.xlu0 0
    %381 = vperm.xlu0 %380, %v256
    %v382 = vpop.permute.xlu0 %381
    %383 = vset.pattern.permute.xlu0 0
    %384 = vperm.xlu0 %383, %v257
    %v385 = vpop.permute.xlu0 %384
    %v386 = vlaneseq
    %v387 = vand.u32 %v386, 127
    %v388 = vlaneseq
    %v389 = vshrl.u32 %v388, 7
    %v390 = vsub.s32 %v387, %v389
    %v391 = vrot.slane %v292, %v390
    %v392 = vadd.s32 %v387, 4294967288
    %v393 = vlaneseq
    %v394 = vshrl.u32 %v393, 7
    %v395 = vsub.s32 %v392, %v394
    %v396 = vrot.slane %v295, %v395
    %vm397 = vcmask 130112
    %v398 = vsel %vm397, %v396, %v391
    %v399 = vadd.s32 %v387, 4294967280
    %v400 = vlaneseq
    %v401 = vshrl.u32 %v400, 7
    %v402 = vsub.s32 %v399, %v401
    %v403 = vrot.slane %v298, %v402
    %vm404 = vcmask 195712
    %v405 = vsel %vm404, %v403, %v398
    %v406 = vadd.s32 %v387, 4294967272
    %v407 = vlaneseq
    %v408 = vshrl.u32 %v407, 7
    %v409 = vsub.s32 %v406, %v408
    %v410 = vrot.slane %v301, %v409
    %vm411 = vcmask 261312
    %v412 = vsel %vm411, %v410, %v405
    %v413 = vadd.s32 %v387, 4294967264
    %v414 = vlaneseq
    %v415 = vshrl.u32 %v414, 7
    %v416 = vsub.s32 %v413, %v415
    %v417 = vrot.slane %v304, %v416
    %vm418 = vcmask 326912
    %v419 = vsel %vm418, %v417, %v412
    %v420 = vadd.s32 %v387, 4294967256
    %v421 = vlaneseq
    %v422 = vshrl.u32 %v421, 7
    %v423 = vsub.s32 %v420, %v422
    %v424 = vrot.slane %v307, %v423
    %vm425 = vcmask 392512
    %v426 = vsel %vm425, %v424, %v419
    %v427 = vadd.s32 %v387, 4294967248
    %v428 = vlaneseq
    %v429 = vshrl.u32 %v428, 7
    %v430 = vsub.s32 %v427, %v429
    %v431 = vrot.slane %v310, %v430
    %vm432 = vcmask 458112
    %v433 = vsel %vm432, %v431, %v426
    %v434 = vadd.s32 %v387, 4294967240
    %v435 = vlaneseq
    %v436 = vshrl.u32 %v435, 7
    %v437 = vsub.s32 %v434, %v436
    %v438 = vrot.slane %v313, %v437
    %vm439 = vcmask 523712
    %v440 = vsel %vm439, %v438, %v433
    %v441 = vadd.s32 %v387, 4294967232
    %v442 = vlaneseq
    %v443 = vshrl.u32 %v442, 7
    %v444 = vsub.s32 %v441, %v443
    %v445 = vrot.slane %v316, %v444
    %vm446 = vcmask 589312
    %v447 = vsel %vm446, %v445, %v440
    %v448 = vadd.s32 %v387, 4294967224
    %v449 = vlaneseq
    %v450 = vshrl.u32 %v449, 7
    %v451 = vsub.s32 %v448, %v450
    %v452 = vrot.slane %v319, %v451
    %vm453 = vcmask 654912
    %v454 = vsel %vm453, %v452, %v447
    %v455 = vadd.s32 %v387, 4294967216
    %v456 = vlaneseq
    %v457 = vshrl.u32 %v456, 7
    %v458 = vsub.s32 %v455, %v457
    %v459 = vrot.slane %v322, %v458
    %vm460 = vcmask 720512
    %v461 = vsel %vm460, %v459, %v454
    %v462 = vadd.s32 %v387, 4294967208
    %v463 = vlaneseq
    %v464 = vshrl.u32 %v463, 7
    %v465 = vsub.s32 %v462, %v464
    %v466 = vrot.slane %v325, %v465
    %vm467 = vcmask 786112
    %v468 = vsel %vm467, %v466, %v461
    %v469 = vadd.s32 %v387, 4294967200
    %v470 = vlaneseq
    %v471 = vshrl.u32 %v470, 7
    %v472 = vsub.s32 %v469, %v471
    %v473 = vrot.slane %v328, %v472
    %vm474 = vcmask 851712
    %v475 = vsel %vm474, %v473, %v468
    %v476 = vadd.s32 %v387, 4294967192
    %v477 = vlaneseq
    %v478 = vshrl.u32 %v477, 7
    %v479 = vsub.s32 %v476, %v478
    %v480 = vrot.slane %v331, %v479
    %vm481 = vcmask 917312
    %v482 = vsel %vm481, %v480, %v475
    %v483 = vadd.s32 %v387, 4294967184
    %v484 = vlaneseq
    %v485 = vshrl.u32 %v484, 7
    %v486 = vsub.s32 %v483, %v485
    %v487 = vrot.slane %v334, %v486
    %vm488 = vcmask 982912
    %v489 = vsel %vm488, %v487, %v482
    %v490 = vadd.s32 %v387, 4294967176
    %v491 = vlaneseq
    %v492 = vshrl.u32 %v491, 7
    %v493 = vsub.s32 %v490, %v492
    %v494 = vrot.slane %v337, %v493
    %vm495 = vcmask 1048512
    %v496 = vsel %vm495, %v494, %v489
    %v497 = vlaneseq
    %v498 = vshrl.u32 %v497, 7
    %v499 = vsub.s32 %v387, %v498
    %v500 = vrot.slane %v340, %v499
    %v501 = vlaneseq
    %v502 = vshrl.u32 %v501, 7
    %v503 = vsub.s32 %v392, %v502
    %v504 = vrot.slane %v343, %v503
    %v505 = vsel %vm397, %v504, %v500
    %v506 = vlaneseq
    %v507 = vshrl.u32 %v506, 7
    %v508 = vsub.s32 %v399, %v507
    %v509 = vrot.slane %v346, %v508
    %v510 = vsel %vm404, %v509, %v505
    %v511 = vlaneseq
    %v512 = vshrl.u32 %v511, 7
    %v513 = vsub.s32 %v406, %v512
    %v514 = vrot.slane %v349, %v513
    %v515 = vsel %vm411, %v514, %v510
    %v516 = vlaneseq
    %v517 = vshrl.u32 %v516, 7
    %v518 = vsub.s32 %v413, %v517
    %v519 = vrot.slane %v352, %v518
    %v520 = vsel %vm418, %v519, %v515
    %v521 = vlaneseq
    %v522 = vshrl.u32 %v521, 7
    %v523 = vsub.s32 %v420, %v522
    %v524 = vrot.slane %v355, %v523
    %v525 = vsel %vm425, %v524, %v520
    %v526 = vlaneseq
    %v527 = vshrl.u32 %v526, 7
    %v528 = vsub.s32 %v427, %v527
    %v529 = vrot.slane %v358, %v528
    %v530 = vsel %vm432, %v529, %v525
    %v531 = vlaneseq
    %v532 = vshrl.u32 %v531, 7
    %v533 = vsub.s32 %v434, %v532
    %v534 = vrot.slane %v361, %v533
    %v535 = vsel %vm439, %v534, %v530
    %v536 = vlaneseq
    %v537 = vshrl.u32 %v536, 7
    %v538 = vsub.s32 %v441, %v537
    %v539 = vrot.slane %v364, %v538
    %v540 = vsel %vm446, %v539, %v535
    %v541 = vlaneseq
    %v542 = vshrl.u32 %v541, 7
    %v543 = vsub.s32 %v448, %v542
    %v544 = vrot.slane %v367, %v543
    %v545 = vsel %vm453, %v544, %v540
    %v546 = vlaneseq
    %v547 = vshrl.u32 %v546, 7
    %v548 = vsub.s32 %v455, %v547
    %v549 = vrot.slane %v370, %v548
    %v550 = vsel %vm460, %v549, %v545
    %v551 = vlaneseq
    %v552 = vshrl.u32 %v551, 7
    %v553 = vsub.s32 %v462, %v552
    %v554 = vrot.slane %v373, %v553
    %v555 = vsel %vm467, %v554, %v550
    %v556 = vlaneseq
    %v557 = vshrl.u32 %v556, 7
    %v558 = vsub.s32 %v469, %v557
    %v559 = vrot.slane %v376, %v558
    %v560 = vsel %vm474, %v559, %v555
    %v561 = vlaneseq
    %v562 = vshrl.u32 %v561, 7
    %v563 = vsub.s32 %v476, %v562
    %v564 = vrot.slane %v379, %v563
    %v565 = vsel %vm481, %v564, %v560
    %v566 = vlaneseq
    %v567 = vshrl.u32 %v566, 7
    %v568 = vsub.s32 %v483, %v567
    %v569 = vrot.slane %v382, %v568
    %v570 = vsel %vm488, %v569, %v565
    %v571 = vlaneseq
    %v572 = vshrl.u32 %v571, 7
    %v573 = vsub.s32 %v490, %v572
    %v574 = vrot.slane %v385, %v573
    %v575 = vsel %vm495, %v574, %v570
    %vm576 = vcmask 1041409
    %v577 = vsel %vm576, %v575, %v496
    %v579 = vadd.f32 %v132, %v577
    %v580 = vlaneseq
    %v581 = vshrl.u32 %v580, 7
    %v582 = vsub.s32 1, %v581
    %v583 = vrot.slane %v124, %v582
    %v584 = vlaneseq
    %v585 = vshrl.u32 %v584, 7
    %v586 = vsub.s32 1, %v585
    %v587 = vrot.slane %v125, %v586
    %v588 = vlaneseq
    %v589 = vshrl.u32 %v588, 7
    %v590 = vsub.s32 1, %v589
    %v591 = vrot.slane %v126, %v590
    %594 = vbcast.lane.b32.xlu0 %v591, 256
    %v595 = vpop.permute.xlu0 %594
    %s597 = sor.u32 256, 8
    %598 = vbcast.lane.b32.xlu0 %v591, %s597
    %v599 = vpop.permute.xlu0 %598
    %s601 = sor.u32 256, 16
    %602 = vbcast.lane.b32.xlu0 %v591, %s601
    %v603 = vpop.permute.xlu0 %602
    %s605 = sor.u32 256, 24
    %606 = vbcast.lane.b32.xlu0 %v591, %s605
    %v607 = vpop.permute.xlu0 %606
    %s609 = sor.u32 256, 32
    %610 = vbcast.lane.b32.xlu0 %v591, %s609
    %v611 = vpop.permute.xlu0 %610
    %s613 = sor.u32 256, 40
    %614 = vbcast.lane.b32.xlu0 %v591, %s613
    %v615 = vpop.permute.xlu0 %614
    %s617 = sor.u32 256, 48
    %618 = vbcast.lane.b32.xlu0 %v591, %s617
    %v619 = vpop.permute.xlu0 %618
    %s621 = sor.u32 256, 56
    %622 = vbcast.lane.b32.xlu0 %v591, %s621
    %v623 = vpop.permute.xlu0 %622
    %s625 = sor.u32 256, 64
    %626 = vbcast.lane.b32.xlu0 %v591, %s625
    %v627 = vpop.permute.xlu0 %626
    %s629 = sor.u32 256, 72
    %630 = vbcast.lane.b32.xlu0 %v591, %s629
    %v631 = vpop.permute.xlu0 %630
    %s633 = sor.u32 256, 80
    %634 = vbcast.lane.b32.xlu0 %v591, %s633
    %v635 = vpop.permute.xlu0 %634
    %s637 = sor.u32 256, 88
    %638 = vbcast.lane.b32.xlu0 %v591, %s637
    %v639 = vpop.permute.xlu0 %638
    %s641 = sor.u32 256, 96
    %642 = vbcast.lane.b32.xlu0 %v591, %s641
    %v643 = vpop.permute.xlu0 %642
    %s645 = sor.u32 256, 104
    %646 = vbcast.lane.b32.xlu0 %v591, %s645
    %v647 = vpop.permute.xlu0 %646
    %s649 = sor.u32 256, 112
    %650 = vbcast.lane.b32.xlu0 %v591, %s649
    %v651 = vpop.permute.xlu0 %650
    %s653 = sor.u32 256, 120
    %654 = vbcast.lane.b32.xlu0 %v591, %s653
    %v655 = vpop.permute.xlu0 %654
    %v672 = vmul.f32 %v583, %v595
    %v673 = vmul.f32 %v583, %v599
    %v674 = vmul.f32 %v583, %v603
    %v675 = vmul.f32 %v583, %v607
    %v676 = vmul.f32 %v583, %v611
    %v677 = vmul.f32 %v583, %v615
    %v678 = vmul.f32 %v583, %v619
    %v679 = vmul.f32 %v583, %v623
    %v680 = vmul.f32 %v583, %v627
    %v681 = vmul.f32 %v583, %v631
    %v682 = vmul.f32 %v583, %v635
    %v683 = vmul.f32 %v583, %v639
    %v684 = vmul.f32 %v583, %v643
    %v685 = vmul.f32 %v583, %v647
    %v686 = vmul.f32 %v583, %v651
    %v687 = vmul.f32 %v583, %v655
    %v688 = vmul.f32 %v587, %v595
    %v689 = vmul.f32 %v587, %v599
    %v690 = vmul.f32 %v587, %v603
    %v691 = vmul.f32 %v587, %v607
    %v692 = vmul.f32 %v587, %v611
    %v693 = vmul.f32 %v587, %v615
    %v694 = vmul.f32 %v587, %v619
    %v695 = vmul.f32 %v587, %v623
    %v696 = vmul.f32 %v587, %v627
    %v697 = vmul.f32 %v587, %v631
    %v698 = vmul.f32 %v587, %v635
    %v699 = vmul.f32 %v587, %v639
    %v700 = vmul.f32 %v587, %v643
    %v701 = vmul.f32 %v587, %v647
    %v702 = vmul.f32 %v587, %v651
    %v703 = vmul.f32 %v587, %v655
    %736 = vset.pattern.permute.xlu0 0
    %737 = vperm.xlu0 %736, %v672
    %v738 = vpop.permute.xlu0 %737
    %739 = vset.pattern.permute.xlu0 0
    %740 = vperm.xlu0 %739, %v673
    %v741 = vpop.permute.xlu0 %740
    %742 = vset.pattern.permute.xlu0 0
    %743 = vperm.xlu0 %742, %v674
    %v744 = vpop.permute.xlu0 %743
    %745 = vset.pattern.permute.xlu0 0
    %746 = vperm.xlu0 %745, %v675
    %v747 = vpop.permute.xlu0 %746
    %748 = vset.pattern.permute.xlu0 0
    %749 = vperm.xlu0 %748, %v676
    %v750 = vpop.permute.xlu0 %749
    %751 = vset.pattern.permute.xlu0 0
    %752 = vperm.xlu0 %751, %v677
    %v753 = vpop.permute.xlu0 %752
    %754 = vset.pattern.permute.xlu0 0
    %755 = vperm.xlu0 %754, %v678
    %v756 = vpop.permute.xlu0 %755
    %757 = vset.pattern.permute.xlu0 0
    %758 = vperm.xlu0 %757, %v679
    %v759 = vpop.permute.xlu0 %758
    %760 = vset.pattern.permute.xlu0 0
    %761 = vperm.xlu0 %760, %v680
    %v762 = vpop.permute.xlu0 %761
    %763 = vset.pattern.permute.xlu0 0
    %764 = vperm.xlu0 %763, %v681
    %v765 = vpop.permute.xlu0 %764
    %766 = vset.pattern.permute.xlu0 0
    %767 = vperm.xlu0 %766, %v682
    %v768 = vpop.permute.xlu0 %767
    %769 = vset.pattern.permute.xlu0 0
    %770 = vperm.xlu0 %769, %v683
    %v771 = vpop.permute.xlu0 %770
    %772 = vset.pattern.permute.xlu0 0
    %773 = vperm.xlu0 %772, %v684
    %v774 = vpop.permute.xlu0 %773
    %775 = vset.pattern.permute.xlu0 0
    %776 = vperm.xlu0 %775, %v685
    %v777 = vpop.permute.xlu0 %776
    %778 = vset.pattern.permute.xlu0 0
    %779 = vperm.xlu0 %778, %v686
    %v780 = vpop.permute.xlu0 %779
    %781 = vset.pattern.permute.xlu0 0
    %782 = vperm.xlu0 %781, %v687
    %v783 = vpop.permute.xlu0 %782
    %784 = vset.pattern.permute.xlu0 0
    %785 = vperm.xlu0 %784, %v688
    %v786 = vpop.permute.xlu0 %785
    %787 = vset.pattern.permute.xlu0 0
    %788 = vperm.xlu0 %787, %v689
    %v789 = vpop.permute.xlu0 %788
    %790 = vset.pattern.permute.xlu0 0
    %791 = vperm.xlu0 %790, %v690
    %v792 = vpop.permute.xlu0 %791
    %793 = vset.pattern.permute.xlu0 0
    %794 = vperm.xlu0 %793, %v691
    %v795 = vpop.permute.xlu0 %794
    %796 = vset.pattern.permute.xlu0 0
    %797 = vperm.xlu0 %796, %v692
    %v798 = vpop.permute.xlu0 %797
    %799 = vset.pattern.permute.xlu0 0
    %800 = vperm.xlu0 %799, %v693
    %v801 = vpop.permute.xlu0 %800
    %802 = vset.pattern.permute.xlu0 0
    %803 = vperm.xlu0 %802, %v694
    %v804 = vpop.permute.xlu0 %803
    %805 = vset.pattern.permute.xlu0 0
    %806 = vperm.xlu0 %805, %v695
    %v807 = vpop.permute.xlu0 %806
    %808 = vset.pattern.permute.xlu0 0
    %809 = vperm.xlu0 %808, %v696
    %v810 = vpop.permute.xlu0 %809
    %811 = vset.pattern.permute.xlu0 0
    %812 = vperm.xlu0 %811, %v697
    %v813 = vpop.permute.xlu0 %812
    %814 = vset.pattern.permute.xlu0 0
    %815 = vperm.xlu0 %814, %v698
    %v816 = vpop.permute.xlu0 %815
    %817 = vset.pattern.permute.xlu0 0
    %818 = vperm.xlu0 %817, %v699
    %v819 = vpop.permute.xlu0 %818
    %820 = vset.pattern.permute.xlu0 0
    %821 = vperm.xlu0 %820, %v700
    %v822 = vpop.permute.xlu0 %821
    %823 = vset.pattern.permute.xlu0 0
    %824 = vperm.xlu0 %823, %v701
    %v825 = vpop.permute.xlu0 %824
    %826 = vset.pattern.permute.xlu0 0
    %827 = vperm.xlu0 %826, %v702
    %v828 = vpop.permute.xlu0 %827
    %829 = vset.pattern.permute.xlu0 0
    %830 = vperm.xlu0 %829, %v703
    %v831 = vpop.permute.xlu0 %830
    %v832 = vlaneseq
    %v833 = vshrl.u32 %v832, 7
    %v834 = vsub.s32 %v387, %v833
    %v835 = vrot.slane %v738, %v834
    %v836 = vlaneseq
    %v837 = vshrl.u32 %v836, 7
    %v838 = vsub.s32 %v392, %v837
    %v839 = vrot.slane %v741, %v838
    %v840 = vsel %vm397, %v839, %v835
    %v841 = vlaneseq
    %v842 = vshrl.u32 %v841, 7
    %v843 = vsub.s32 %v399, %v842
    %v844 = vrot.slane %v744, %v843
    %v845 = vsel %vm404, %v844, %v840
    %v846 = vlaneseq
    %v847 = vshrl.u32 %v846, 7
    %v848 = vsub.s32 %v406, %v847
    %v849 = vrot.slane %v747, %v848
    %v850 = vsel %vm411, %v849, %v845
    %v851 = vlaneseq
    %v852 = vshrl.u32 %v851, 7
    %v853 = vsub.s32 %v413, %v852
    %v854 = vrot.slane %v750, %v853
    %v855 = vsel %vm418, %v854, %v850
    %v856 = vlaneseq
    %v857 = vshrl.u32 %v856, 7
    %v858 = vsub.s32 %v420, %v857
    %v859 = vrot.slane %v753, %v858
    %v860 = vsel %vm425, %v859, %v855
    %v861 = vlaneseq
    %v862 = vshrl.u32 %v861, 7
    %v863 = vsub.s32 %v427, %v862
    %v864 = vrot.slane %v756, %v863
    %v865 = vsel %vm432, %v864, %v860
    %v866 = vlaneseq
    %v867 = vshrl.u32 %v866, 7
    %v868 = vsub.s32 %v434, %v867
    %v869 = vrot.slane %v759, %v868
    %v870 = vsel %vm439, %v869, %v865
    %v871 = vlaneseq
    %v872 = vshrl.u32 %v871, 7
    %v873 = vsub.s32 %v441, %v872
    %v874 = vrot.slane %v762, %v873
    %v875 = vsel %vm446, %v874, %v870
    %v876 = vlaneseq
    %v877 = vshrl.u32 %v876, 7
    %v878 = vsub.s32 %v448, %v877
    %v879 = vrot.slane %v765, %v878
    %v880 = vsel %vm453, %v879, %v875
    %v881 = vlaneseq
    %v882 = vshrl.u32 %v881, 7
    %v883 = vsub.s32 %v455, %v882
    %v884 = vrot.slane %v768, %v883
    %v885 = vsel %vm460, %v884, %v880
    %v886 = vlaneseq
    %v887 = vshrl.u32 %v886, 7
    %v888 = vsub.s32 %v462, %v887
    %v889 = vrot.slane %v771, %v888
    %v890 = vsel %vm467, %v889, %v885
    %v891 = vlaneseq
    %v892 = vshrl.u32 %v891, 7
    %v893 = vsub.s32 %v469, %v892
    %v894 = vrot.slane %v774, %v893
    %v895 = vsel %vm474, %v894, %v890
    %v896 = vlaneseq
    %v897 = vshrl.u32 %v896, 7
    %v898 = vsub.s32 %v476, %v897
    %v899 = vrot.slane %v777, %v898
    %v900 = vsel %vm481, %v899, %v895
    %v901 = vlaneseq
    %v902 = vshrl.u32 %v901, 7
    %v903 = vsub.s32 %v483, %v902
    %v904 = vrot.slane %v780, %v903
    %v905 = vsel %vm488, %v904, %v900
    %v906 = vlaneseq
    %v907 = vshrl.u32 %v906, 7
    %v908 = vsub.s32 %v490, %v907
    %v909 = vrot.slane %v783, %v908
    %v910 = vsel %vm495, %v909, %v905
    %v911 = vlaneseq
    %v912 = vshrl.u32 %v911, 7
    %v913 = vsub.s32 %v387, %v912
    %v914 = vrot.slane %v786, %v913
    %v915 = vlaneseq
    %v916 = vshrl.u32 %v915, 7
    %v917 = vsub.s32 %v392, %v916
    %v918 = vrot.slane %v789, %v917
    %v919 = vsel %vm397, %v918, %v914
    %v920 = vlaneseq
    %v921 = vshrl.u32 %v920, 7
    %v922 = vsub.s32 %v399, %v921
    %v923 = vrot.slane %v792, %v922
    %v924 = vsel %vm404, %v923, %v919
    %v925 = vlaneseq
    %v926 = vshrl.u32 %v925, 7
    %v927 = vsub.s32 %v406, %v926
    %v928 = vrot.slane %v795, %v927
    %v929 = vsel %vm411, %v928, %v924
    %v930 = vlaneseq
    %v931 = vshrl.u32 %v930, 7
    %v932 = vsub.s32 %v413, %v931
    %v933 = vrot.slane %v798, %v932
    %v934 = vsel %vm418, %v933, %v929
    %v935 = vlaneseq
    %v936 = vshrl.u32 %v935, 7
    %v937 = vsub.s32 %v420, %v936
    %v938 = vrot.slane %v801, %v937
    %v939 = vsel %vm425, %v938, %v934
    %v940 = vlaneseq
    %v941 = vshrl.u32 %v940, 7
    %v942 = vsub.s32 %v427, %v941
    %v943 = vrot.slane %v804, %v942
    %v944 = vsel %vm432, %v943, %v939
    %v945 = vlaneseq
    %v946 = vshrl.u32 %v945, 7
    %v947 = vsub.s32 %v434, %v946
    %v948 = vrot.slane %v807, %v947
    %v949 = vsel %vm439, %v948, %v944
    %v950 = vlaneseq
    %v951 = vshrl.u32 %v950, 7
    %v952 = vsub.s32 %v441, %v951
    %v953 = vrot.slane %v810, %v952
    %v954 = vsel %vm446, %v953, %v949
    %v955 = vlaneseq
    %v956 = vshrl.u32 %v955, 7
    %v957 = vsub.s32 %v448, %v956
    %v958 = vrot.slane %v813, %v957
    %v959 = vsel %vm453, %v958, %v954
    %v960 = vlaneseq
    %v961 = vshrl.u32 %v960, 7
    %v962 = vsub.s32 %v455, %v961
    %v963 = vrot.slane %v816, %v962
    %v964 = vsel %vm460, %v963, %v959
    %v965 = vlaneseq
    %v966 = vshrl.u32 %v965, 7
    %v967 = vsub.s32 %v462, %v966
    %v968 = vrot.slane %v819, %v967
    %v969 = vsel %vm467, %v968, %v964
    %v970 = vlaneseq
    %v971 = vshrl.u32 %v970, 7
    %v972 = vsub.s32 %v469, %v971
    %v973 = vrot.slane %v822, %v972
    %v974 = vsel %vm474, %v973, %v969
    %v975 = vlaneseq
    %v976 = vshrl.u32 %v975, 7
    %v977 = vsub.s32 %v476, %v976
    %v978 = vrot.slane %v825, %v977
    %v979 = vsel %vm481, %v978, %v974
    %v980 = vlaneseq
    %v981 = vshrl.u32 %v980, 7
    %v982 = vsub.s32 %v483, %v981
    %v983 = vrot.slane %v828, %v982
    %v984 = vsel %vm488, %v983, %v979
    %v985 = vlaneseq
    %v986 = vshrl.u32 %v985, 7
    %v987 = vsub.s32 %v490, %v986
    %v988 = vrot.slane %v831, %v987
    %v989 = vsel %vm495, %v988, %v984
    %v990 = vsel %vm576, %v989, %v910
    %v992 = vadd.f32 %v579, %v990
    %v993 = vlaneseq
    %v994 = vshrl.u32 %v993, 7
    %v995 = vsub.s32 2, %v994
    %v996 = vrot.slane %v124, %v995
    %v997 = vlaneseq
    %v998 = vshrl.u32 %v997, 7
    %v999 = vsub.s32 2, %v998
    %v1000 = vrot.slane %v125, %v999
    %v1001 = vlaneseq
    %v1002 = vshrl.u32 %v1001, 7
    %v1003 = vsub.s32 2, %v1002
    %v1004 = vrot.slane %v126, %v1003
    %1007 = vbcast.lane.b32.xlu0 %v1004, 256
    %v1008 = vpop.permute.xlu0 %1007
    %s1010 = sor.u32 256, 8
    %1011 = vbcast.lane.b32.xlu0 %v1004, %s1010
    %v1012 = vpop.permute.xlu0 %1011
    %s1014 = sor.u32 256, 16
    %1015 = vbcast.lane.b32.xlu0 %v1004, %s1014
    %v1016 = vpop.permute.xlu0 %1015
    %s1018 = sor.u32 256, 24
    %1019 = vbcast.lane.b32.xlu0 %v1004, %s1018
    %v1020 = vpop.permute.xlu0 %1019
    %s1022 = sor.u32 256, 32
    %1023 = vbcast.lane.b32.xlu0 %v1004, %s1022
    %v1024 = vpop.permute.xlu0 %1023
    %s1026 = sor.u32 256, 40
    %1027 = vbcast.lane.b32.xlu0 %v1004, %s1026
    %v1028 = vpop.permute.xlu0 %1027
    %s1030 = sor.u32 256, 48
    %1031 = vbcast.lane.b32.xlu0 %v1004, %s1030
    %v1032 = vpop.permute.xlu0 %1031
    %s1034 = sor.u32 256, 56
    %1035 = vbcast.lane.b32.xlu0 %v1004, %s1034
    %v1036 = vpop.permute.xlu0 %1035
    %s1038 = sor.u32 256, 64
    %1039 = vbcast.lane.b32.xlu0 %v1004, %s1038
    %v1040 = vpop.permute.xlu0 %1039
    %s1042 = sor.u32 256, 72
    %1043 = vbcast.lane.b32.xlu0 %v1004, %s1042
    %v1044 = vpop.permute.xlu0 %1043
    %s1046 = sor.u32 256, 80
    %1047 = vbcast.lane.b32.xlu0 %v1004, %s1046
    %v1048 = vpop.permute.xlu0 %1047
    %s1050 = sor.u32 256, 88
    %1051 = vbcast.lane.b32.xlu0 %v1004, %s1050
    %v1052 = vpop.permute.xlu0 %1051
    %s1054 = sor.u32 256, 96
    %1055 = vbcast.lane.b32.xlu0 %v1004, %s1054
    %v1056 = vpop.permute.xlu0 %1055
    %s1058 = sor.u32 256, 104
    %1059 = vbcast.lane.b32.xlu0 %v1004, %s1058
    %v1060 = vpop.permute.xlu0 %1059
    %s1062 = sor.u32 256, 112
    %1063 = vbcast.lane.b32.xlu0 %v1004, %s1062
    %v1064 = vpop.permute.xlu0 %1063
    %s1066 = sor.u32 256, 120
    %1067 = vbcast.lane.b32.xlu0 %v1004, %s1066
    %v1068 = vpop.permute.xlu0 %1067
    %v1085 = vmul.f32 %v996, %v1008
    %v1086 = vmul.f32 %v996, %v1012
    %v1087 = vmul.f32 %v996, %v1016
    %v1088 = vmul.f32 %v996, %v1020
    %v1089 = vmul.f32 %v996, %v1024
    %v1090 = vmul.f32 %v996, %v1028
    %v1091 = vmul.f32 %v996, %v1032
    %v1092 = vmul.f32 %v996, %v1036
    %v1093 = vmul.f32 %v996, %v1040
    %v1094 = vmul.f32 %v996, %v1044
    %v1095 = vmul.f32 %v996, %v1048
    %v1096 = vmul.f32 %v996, %v1052
    %v1097 = vmul.f32 %v996, %v1056
    %v1098 = vmul.f32 %v996, %v1060
    %v1099 = vmul.f32 %v996, %v1064
    %v1100 = vmul.f32 %v996, %v1068
    %v1101 = vmul.f32 %v1000, %v1008
    %v1102 = vmul.f32 %v1000, %v1012
    %v1103 = vmul.f32 %v1000, %v1016
    %v1104 = vmul.f32 %v1000, %v1020
    %v1105 = vmul.f32 %v1000, %v1024
    %v1106 = vmul.f32 %v1000, %v1028
    %v1107 = vmul.f32 %v1000, %v1032
    %v1108 = vmul.f32 %v1000, %v1036
    %v1109 = vmul.f32 %v1000, %v1040
    %v1110 = vmul.f32 %v1000, %v1044
    %v1111 = vmul.f32 %v1000, %v1048
    %v1112 = vmul.f32 %v1000, %v1052
    %v1113 = vmul.f32 %v1000, %v1056
    %v1114 = vmul.f32 %v1000, %v1060
    %v1115 = vmul.f32 %v1000, %v1064
    %v1116 = vmul.f32 %v1000, %v1068
    %1149 = vset.pattern.permute.xlu0 0
    %1150 = vperm.xlu0 %1149, %v1085
    %v1151 = vpop.permute.xlu0 %1150
    %1152 = vset.pattern.permute.xlu0 0
    %1153 = vperm.xlu0 %1152, %v1086
    %v1154 = vpop.permute.xlu0 %1153
    %1155 = vset.pattern.permute.xlu0 0
    %1156 = vperm.xlu0 %1155, %v1087
    %v1157 = vpop.permute.xlu0 %1156
    %1158 = vset.pattern.permute.xlu0 0
    %1159 = vperm.xlu0 %1158, %v1088
    %v1160 = vpop.permute.xlu0 %1159
    %1161 = vset.pattern.permute.xlu0 0
    %1162 = vperm.xlu0 %1161, %v1089
    %v1163 = vpop.permute.xlu0 %1162
    %1164 = vset.pattern.permute.xlu0 0
    %1165 = vperm.xlu0 %1164, %v1090
    %v1166 = vpop.permute.xlu0 %1165
    %1167 = vset.pattern.permute.xlu0 0
    %1168 = vperm.xlu0 %1167, %v1091
    %v1169 = vpop.permute.xlu0 %1168
    %1170 = vset.pattern.permute.xlu0 0
    %1171 = vperm.xlu0 %1170, %v1092
    %v1172 = vpop.permute.xlu0 %1171
    %1173 = vset.pattern.permute.xlu0 0
    %1174 = vperm.xlu0 %1173, %v1093
    %v1175 = vpop.permute.xlu0 %1174
    %1176 = vset.pattern.permute.xlu0 0
    %1177 = vperm.xlu0 %1176, %v1094
    %v1178 = vpop.permute.xlu0 %1177
    %1179 = vset.pattern.permute.xlu0 0
    %1180 = vperm.xlu0 %1179, %v1095
    %v1181 = vpop.permute.xlu0 %1180
    %1182 = vset.pattern.permute.xlu0 0
    %1183 = vperm.xlu0 %1182, %v1096
    %v1184 = vpop.permute.xlu0 %1183
    %1185 = vset.pattern.permute.xlu0 0
    %1186 = vperm.xlu0 %1185, %v1097
    %v1187 = vpop.permute.xlu0 %1186
    %1188 = vset.pattern.permute.xlu0 0
    %1189 = vperm.xlu0 %1188, %v1098
    %v1190 = vpop.permute.xlu0 %1189
    %1191 = vset.pattern.permute.xlu0 0
    %1192 = vperm.xlu0 %1191, %v1099
    %v1193 = vpop.permute.xlu0 %1192
    %1194 = vset.pattern.permute.xlu0 0
    %1195 = vperm.xlu0 %1194, %v1100
    %v1196 = vpop.permute.xlu0 %1195
    %1197 = vset.pattern.permute.xlu0 0
    %1198 = vperm.xlu0 %1197, %v1101
    %v1199 = vpop.permute.xlu0 %1198
    %1200 = vset.pattern.permute.xlu0 0
    %1201 = vperm.xlu0 %1200, %v1102
    %v1202 = vpop.permute.xlu0 %1201
    %1203 = vset.pattern.permute.xlu0 0
    %1204 = vperm.xlu0 %1203, %v1103
    %v1205 = vpop.permute.xlu0 %1204
    %1206 = vset.pattern.permute.xlu0 0
    %1207 = vperm.xlu0 %1206, %v1104
    %v1208 = vpop.permute.xlu0 %1207
    %1209 = vset.pattern.permute.xlu0 0
    %1210 = vperm.xlu0 %1209, %v1105
    %v1211 = vpop.permute.xlu0 %1210
    %1212 = vset.pattern.permute.xlu0 0
    %1213 = vperm.xlu0 %1212, %v1106
    %v1214 = vpop.permute.xlu0 %1213
    %1215 = vset.pattern.permute.xlu0 0
    %1216 = vperm.xlu0 %1215, %v1107
    %v1217 = vpop.permute.xlu0 %1216
    %1218 = vset.pattern.permute.xlu0 0
    %1219 = vperm.xlu0 %1218, %v1108
    %v1220 = vpop.permute.xlu0 %1219
    %1221 = vset.pattern.permute.xlu0 0
    %1222 = vperm.xlu0 %1221, %v1109
    %v1223 = vpop.permute.xlu0 %1222
    %1224 = vset.pattern.permute.xlu0 0
    %1225 = vperm.xlu0 %1224, %v1110
    %v1226 = vpop.permute.xlu0 %1225
    %1227 = vset.pattern.permute.xlu0 0
    %1228 = vperm.xlu0 %1227, %v1111
    %v1229 = vpop.permute.xlu0 %1228
    %1230 = vset.pattern.permute.xlu0 0
    %1231 = vperm.xlu0 %1230, %v1112
    %v1232 = vpop.permute.xlu0 %1231
    %1233 = vset.pattern.permute.xlu0 0
    %1234 = vperm.xlu0 %1233, %v1113
    %v1235 = vpop.permute.xlu0 %1234
    %1236 = vset.pattern.permute.xlu0 0
    %1237 = vperm.xlu0 %1236, %v1114
    %v1238 = vpop.permute.xlu0 %1237
    %1239 = vset.pattern.permute.xlu0 0
    %1240 = vperm.xlu0 %1239, %v1115
    %v1241 = vpop.permute.xlu0 %1240
    %1242 = vset.pattern.permute.xlu0 0
    %1243 = vperm.xlu0 %1242, %v1116
    %v1244 = vpop.permute.xlu0 %1243
    %v1245 = vlaneseq
    %v1246 = vshrl.u32 %v1245, 7
    %v1247 = vsub.s32 %v387, %v1246
    %v1248 = vrot.slane %v1151, %v1247
    %v1249 = vlaneseq
    %v1250 = vshrl.u32 %v1249, 7
    %v1251 = vsub.s32 %v392, %v1250
    %v1252 = vrot.slane %v1154, %v1251
    %v1253 = vsel %vm397, %v1252, %v1248
    %v1254 = vlaneseq
    %v1255 = vshrl.u32 %v1254, 7
    %v1256 = vsub.s32 %v399, %v1255
    %v1257 = vrot.slane %v1157, %v1256
    %v1258 = vsel %vm404, %v1257, %v1253
    %v1259 = vlaneseq
    %v1260 = vshrl.u32 %v1259, 7
    %v1261 = vsub.s32 %v406, %v1260
    %v1262 = vrot.slane %v1160, %v1261
    %v1263 = vsel %vm411, %v1262, %v1258
    %v1264 = vlaneseq
    %v1265 = vshrl.u32 %v1264, 7
    %v1266 = vsub.s32 %v413, %v1265
    %v1267 = vrot.slane %v1163, %v1266
    %v1268 = vsel %vm418, %v1267, %v1263
    %v1269 = vlaneseq
    %v1270 = vshrl.u32 %v1269, 7
    %v1271 = vsub.s32 %v420, %v1270
    %v1272 = vrot.slane %v1166, %v1271
    %v1273 = vsel %vm425, %v1272, %v1268
    %v1274 = vlaneseq
    %v1275 = vshrl.u32 %v1274, 7
    %v1276 = vsub.s32 %v427, %v1275
    %v1277 = vrot.slane %v1169, %v1276
    %v1278 = vsel %vm432, %v1277, %v1273
    %v1279 = vlaneseq
    %v1280 = vshrl.u32 %v1279, 7
    %v1281 = vsub.s32 %v434, %v1280
    %v1282 = vrot.slane %v1172, %v1281
    %v1283 = vsel %vm439, %v1282, %v1278
    %v1284 = vlaneseq
    %v1285 = vshrl.u32 %v1284, 7
    %v1286 = vsub.s32 %v441, %v1285
    %v1287 = vrot.slane %v1175, %v1286
    %v1288 = vsel %vm446, %v1287, %v1283
    %v1289 = vlaneseq
    %v1290 = vshrl.u32 %v1289, 7
    %v1291 = vsub.s32 %v448, %v1290
    %v1292 = vrot.slane %v1178, %v1291
    %v1293 = vsel %vm453, %v1292, %v1288
    %v1294 = vlaneseq
    %v1295 = vshrl.u32 %v1294, 7
    %v1296 = vsub.s32 %v455, %v1295
    %v1297 = vrot.slane %v1181, %v1296
    %v1298 = vsel %vm460, %v1297, %v1293
    %v1299 = vlaneseq
    %v1300 = vshrl.u32 %v1299, 7
    %v1301 = vsub.s32 %v462, %v1300
    %v1302 = vrot.slane %v1184, %v1301
    %v1303 = vsel %vm467, %v1302, %v1298
    %v1304 = vlaneseq
    %v1305 = vshrl.u32 %v1304, 7
    %v1306 = vsub.s32 %v469, %v1305
    %v1307 = vrot.slane %v1187, %v1306
    %v1308 = vsel %vm474, %v1307, %v1303
    %v1309 = vlaneseq
    %v1310 = vshrl.u32 %v1309, 7
    %v1311 = vsub.s32 %v476, %v1310
    %v1312 = vrot.slane %v1190, %v1311
    %v1313 = vsel %vm481, %v1312, %v1308
    %v1314 = vlaneseq
    %v1315 = vshrl.u32 %v1314, 7
    %v1316 = vsub.s32 %v483, %v1315
    %v1317 = vrot.slane %v1193, %v1316
    %v1318 = vsel %vm488, %v1317, %v1313
    %v1319 = vlaneseq
    %v1320 = vshrl.u32 %v1319, 7
    %v1321 = vsub.s32 %v490, %v1320
    %v1322 = vrot.slane %v1196, %v1321
    %v1323 = vsel %vm495, %v1322, %v1318
    %v1324 = vlaneseq
    %v1325 = vshrl.u32 %v1324, 7
    %v1326 = vsub.s32 %v387, %v1325
    %v1327 = vrot.slane %v1199, %v1326
    %v1328 = vlaneseq
    %v1329 = vshrl.u32 %v1328, 7
    %v1330 = vsub.s32 %v392, %v1329
    %v1331 = vrot.slane %v1202, %v1330
    %v1332 = vsel %vm397, %v1331, %v1327
    %v1333 = vlaneseq
    %v1334 = vshrl.u32 %v1333, 7
    %v1335 = vsub.s32 %v399, %v1334
    %v1336 = vrot.slane %v1205, %v1335
    %v1337 = vsel %vm404, %v1336, %v1332
    %v1338 = vlaneseq
    %v1339 = vshrl.u32 %v1338, 7
    %v1340 = vsub.s32 %v406, %v1339
    %v1341 = vrot.slane %v1208, %v1340
    %v1342 = vsel %vm411, %v1341, %v1337
    %v1343 = vlaneseq
    %v1344 = vshrl.u32 %v1343, 7
    %v1345 = vsub.s32 %v413, %v1344
    %v1346 = vrot.slane %v1211, %v1345
    %v1347 = vsel %vm418, %v1346, %v1342
    %v1348 = vlaneseq
    %v1349 = vshrl.u32 %v1348, 7
    %v1350 = vsub.s32 %v420, %v1349
    %v1351 = vrot.slane %v1214, %v1350
    %v1352 = vsel %vm425, %v1351, %v1347
    %v1353 = vlaneseq
    %v1354 = vshrl.u32 %v1353, 7
    %v1355 = vsub.s32 %v427, %v1354
    %v1356 = vrot.slane %v1217, %v1355
    %v1357 = vsel %vm432, %v1356, %v1352
    %v1358 = vlaneseq
    %v1359 = vshrl.u32 %v1358, 7
    %v1360 = vsub.s32 %v434, %v1359
    %v1361 = vrot.slane %v1220, %v1360
    %v1362 = vsel %vm439, %v1361, %v1357
    %v1363 = vlaneseq
    %v1364 = vshrl.u32 %v1363, 7
    %v1365 = vsub.s32 %v441, %v1364
    %v1366 = vrot.slane %v1223, %v1365
    %v1367 = vsel %vm446, %v1366, %v1362
    %v1368 = vlaneseq
    %v1369 = vshrl.u32 %v1368, 7
    %v1370 = vsub.s32 %v448, %v1369
    %v1371 = vrot.slane %v1226, %v1370
    %v1372 = vsel %vm453, %v1371, %v1367
    %v1373 = vlaneseq
    %v1374 = vshrl.u32 %v1373, 7
    %v1375 = vsub.s32 %v455, %v1374
    %v1376 = vrot.slane %v1229, %v1375
    %v1377 = vsel %vm460, %v1376, %v1372
    %v1378 = vlaneseq
    %v1379 = vshrl.u32 %v1378, 7
    %v1380 = vsub.s32 %v462, %v1379
    %v1381 = vrot.slane %v1232, %v1380
    %v1382 = vsel %vm467, %v1381, %v1377
    %v1383 = vlaneseq
    %v1384 = vshrl.u32 %v1383, 7
    %v1385 = vsub.s32 %v469, %v1384
    %v1386 = vrot.slane %v1235, %v1385
    %v1387 = vsel %vm474, %v1386, %v1382
    %v1388 = vlaneseq
    %v1389 = vshrl.u32 %v1388, 7
    %v1390 = vsub.s32 %v476, %v1389
    %v1391 = vrot.slane %v1238, %v1390
    %v1392 = vsel %vm481, %v1391, %v1387
    %v1393 = vlaneseq
    %v1394 = vshrl.u32 %v1393, 7
    %v1395 = vsub.s32 %v483, %v1394
    %v1396 = vrot.slane %v1241, %v1395
    %v1397 = vsel %vm488, %v1396, %v1392
    %v1398 = vlaneseq
    %v1399 = vshrl.u32 %v1398, 7
    %v1400 = vsub.s32 %v490, %v1399
    %v1401 = vrot.slane %v1244, %v1400
    %v1402 = vsel %vm495, %v1401, %v1397
    %v1403 = vsel %vm576, %v1402, %v1323
    %v1405 = vadd.f32 %v992, %v1403
    %v1406 = vlaneseq
    %v1407 = vshrl.u32 %v1406, 7
    %v1408 = vsub.s32 3, %v1407
    %v1409 = vrot.slane %v124, %v1408
    %v1410 = vlaneseq
    %v1411 = vshrl.u32 %v1410, 7
    %v1412 = vsub.s32 3, %v1411
    %v1413 = vrot.slane %v125, %v1412
    %v1414 = vlaneseq
    %v1415 = vshrl.u32 %v1414, 7
    %v1416 = vsub.s32 3, %v1415
    %v1417 = vrot.slane %v126, %v1416
    %1420 = vbcast.lane.b32.xlu0 %v1417, 256
    %v1421 = vpop.permute.xlu0 %1420
    %s1423 = sor.u32 256, 8
    %1424 = vbcast.lane.b32.xlu0 %v1417, %s1423
    %v1425 = vpop.permute.xlu0 %1424
    %s1427 = sor.u32 256, 16
    %1428 = vbcast.lane.b32.xlu0 %v1417, %s1427
    %v1429 = vpop.permute.xlu0 %1428
    %s1431 = sor.u32 256, 24
    %1432 = vbcast.lane.b32.xlu0 %v1417, %s1431
    %v1433 = vpop.permute.xlu0 %1432
    %s1435 = sor.u32 256, 32
    %1436 = vbcast.lane.b32.xlu0 %v1417, %s1435
    %v1437 = vpop.permute.xlu0 %1436
    %s1439 = sor.u32 256, 40
    %1440 = vbcast.lane.b32.xlu0 %v1417, %s1439
    %v1441 = vpop.permute.xlu0 %1440
    %s1443 = sor.u32 256, 48
    %1444 = vbcast.lane.b32.xlu0 %v1417, %s1443
    %v1445 = vpop.permute.xlu0 %1444
    %s1447 = sor.u32 256, 56
    %1448 = vbcast.lane.b32.xlu0 %v1417, %s1447
    %v1449 = vpop.permute.xlu0 %1448
    %s1451 = sor.u32 256, 64
    %1452 = vbcast.lane.b32.xlu0 %v1417, %s1451
    %v1453 = vpop.permute.xlu0 %1452
    %s1455 = sor.u32 256, 72
    %1456 = vbcast.lane.b32.xlu0 %v1417, %s1455
    %v1457 = vpop.permute.xlu0 %1456
    %s1459 = sor.u32 256, 80
    %1460 = vbcast.lane.b32.xlu0 %v1417, %s1459
    %v1461 = vpop.permute.xlu0 %1460
    %s1463 = sor.u32 256, 88
    %1464 = vbcast.lane.b32.xlu0 %v1417, %s1463
    %v1465 = vpop.permute.xlu0 %1464
    %s1467 = sor.u32 256, 96
    %1468 = vbcast.lane.b32.xlu0 %v1417, %s1467
    %v1469 = vpop.permute.xlu0 %1468
    %s1471 = sor.u32 256, 104
    %1472 = vbcast.lane.b32.xlu0 %v1417, %s1471
    %v1473 = vpop.permute.xlu0 %1472
    %s1475 = sor.u32 256, 112
    %1476 = vbcast.lane.b32.xlu0 %v1417, %s1475
    %v1477 = vpop.permute.xlu0 %1476
    %s1479 = sor.u32 256, 120
    %1480 = vbcast.lane.b32.xlu0 %v1417, %s1479
    %v1481 = vpop.permute.xlu0 %1480
    %v1498 = vmul.f32 %v1409, %v1421
    %v1499 = vmul.f32 %v1409, %v1425
    %v1500 = vmul.f32 %v1409, %v1429
    %v1501 = vmul.f32 %v1409, %v1433
    %v1502 = vmul.f32 %v1409, %v1437
    %v1503 = vmul.f32 %v1409, %v1441
    %v1504 = vmul.f32 %v1409, %v1445
    %v1505 = vmul.f32 %v1409, %v1449
    %v1506 = vmul.f32 %v1409, %v1453
    %v1507 = vmul.f32 %v1409, %v1457
    %v1508 = vmul.f32 %v1409, %v1461
    %v1509 = vmul.f32 %v1409, %v1465
    %v1510 = vmul.f32 %v1409, %v1469
    %v1511 = vmul.f32 %v1409, %v1473
    %v1512 = vmul.f32 %v1409, %v1477
    %v1513 = vmul.f32 %v1409, %v1481
    %v1514 = vmul.f32 %v1413, %v1421
    %v1515 = vmul.f32 %v1413, %v1425
    %v1516 = vmul.f32 %v1413, %v1429
    %v1517 = vmul.f32 %v1413, %v1433
    %v1518 = vmul.f32 %v1413, %v1437
    %v1519 = vmul.f32 %v1413, %v1441
    %v1520 = vmul.f32 %v1413, %v1445
    %v1521 = vmul.f32 %v1413, %v1449
    %v1522 = vmul.f32 %v1413, %v1453
    %v1523 = vmul.f32 %v1413, %v1457
    %v1524 = vmul.f32 %v1413, %v1461
    %v1525 = vmul.f32 %v1413, %v1465
    %v1526 = vmul.f32 %v1413, %v1469
    %v1527 = vmul.f32 %v1413, %v1473
    %v1528 = vmul.f32 %v1413, %v1477
    %v1529 = vmul.f32 %v1413, %v1481
    %1562 = vset.pattern.permute.xlu0 0
    %1563 = vperm.xlu0 %1562, %v1498
    %v1564 = vpop.permute.xlu0 %1563
    %1565 = vset.pattern.permute.xlu0 0
    %1566 = vperm.xlu0 %1565, %v1499
    %v1567 = vpop.permute.xlu0 %1566
    %1568 = vset.pattern.permute.xlu0 0
    %1569 = vperm.xlu0 %1568, %v1500
    %v1570 = vpop.permute.xlu0 %1569
    %1571 = vset.pattern.permute.xlu0 0
    %1572 = vperm.xlu0 %1571, %v1501
    %v1573 = vpop.permute.xlu0 %1572
    %1574 = vset.pattern.permute.xlu0 0
    %1575 = vperm.xlu0 %1574, %v1502
    %v1576 = vpop.permute.xlu0 %1575
    %1577 = vset.pattern.permute.xlu0 0
    %1578 = vperm.xlu0 %1577, %v1503
    %v1579 = vpop.permute.xlu0 %1578
    %1580 = vset.pattern.permute.xlu0 0
    %1581 = vperm.xlu0 %1580, %v1504
    %v1582 = vpop.permute.xlu0 %1581
    %1583 = vset.pattern.permute.xlu0 0
    %1584 = vperm.xlu0 %1583, %v1505
    %v1585 = vpop.permute.xlu0 %1584
    %1586 = vset.pattern.permute.xlu0 0
    %1587 = vperm.xlu0 %1586, %v1506
    %v1588 = vpop.permute.xlu0 %1587
    %1589 = vset.pattern.permute.xlu0 0
    %1590 = vperm.xlu0 %1589, %v1507
    %v1591 = vpop.permute.xlu0 %1590
    %1592 = vset.pattern.permute.xlu0 0
    %1593 = vperm.xlu0 %1592, %v1508
    %v1594 = vpop.permute.xlu0 %1593
    %1595 = vset.pattern.permute.xlu0 0
    %1596 = vperm.xlu0 %1595, %v1509
    %v1597 = vpop.permute.xlu0 %1596
    %1598 = vset.pattern.permute.xlu0 0
    %1599 = vperm.xlu0 %1598, %v1510
    %v1600 = vpop.permute.xlu0 %1599
    %1601 = vset.pattern.permute.xlu0 0
    %1602 = vperm.xlu0 %1601, %v1511
    %v1603 = vpop.permute.xlu0 %1602
    %1604 = vset.pattern.permute.xlu0 0
    %1605 = vperm.xlu0 %1604, %v1512
    %v1606 = vpop.permute.xlu0 %1605
    %1607 = vset.pattern.permute.xlu0 0
    %1608 = vperm.xlu0 %1607, %v1513
    %v1609 = vpop.permute.xlu0 %1608
    %1610 = vset.pattern.permute.xlu0 0
    %1611 = vperm.xlu0 %1610, %v1514
    %v1612 = vpop.permute.xlu0 %1611
    %1613 = vset.pattern.permute.xlu0 0
    %1614 = vperm.xlu0 %1613, %v1515
    %v1615 = vpop.permute.xlu0 %1614
    %1616 = vset.pattern.permute.xlu0 0
    %1617 = vperm.xlu0 %1616, %v1516
    %v1618 = vpop.permute.xlu0 %1617
    %1619 = vset.pattern.permute.xlu0 0
    %1620 = vperm.xlu0 %1619, %v1517
    %v1621 = vpop.permute.xlu0 %1620
    %1622 = vset.pattern.permute.xlu0 0
    %1623 = vperm.xlu0 %1622, %v1518
    %v1624 = vpop.permute.xlu0 %1623
    %1625 = vset.pattern.permute.xlu0 0
    %1626 = vperm.xlu0 %1625, %v1519
    %v1627 = vpop.permute.xlu0 %1626
    %1628 = vset.pattern.permute.xlu0 0
    %1629 = vperm.xlu0 %1628, %v1520
    %v1630 = vpop.permute.xlu0 %1629
    %1631 = vset.pattern.permute.xlu0 0
    %1632 = vperm.xlu0 %1631, %v1521
    %v1633 = vpop.permute.xlu0 %1632
    %1634 = vset.pattern.permute.xlu0 0
    %1635 = vperm.xlu0 %1634, %v1522
    %v1636 = vpop.permute.xlu0 %1635
    %1637 = vset.pattern.permute.xlu0 0
    %1638 = vperm.xlu0 %1637, %v1523
    %v1639 = vpop.permute.xlu0 %1638
    %1640 = vset.pattern.permute.xlu0 0
    %1641 = vperm.xlu0 %1640, %v1524
    %v1642 = vpop.permute.xlu0 %1641
    %1643 = vset.pattern.permute.xlu0 0
    %1644 = vperm.xlu0 %1643, %v1525
    %v1645 = vpop.permute.xlu0 %1644
    %1646 = vset.pattern.permute.xlu0 0
    %1647 = vperm.xlu0 %1646, %v1526
    %v1648 = vpop.permute.xlu0 %1647
    %1649 = vset.pattern.permute.xlu0 0
    %1650 = vperm.xlu0 %1649, %v1527
    %v1651 = vpop.permute.xlu0 %1650
    %1652 = vset.pattern.permute.xlu0 0
    %1653 = vperm.xlu0 %1652, %v1528
    %v1654 = vpop.permute.xlu0 %1653
    %1655 = vset.pattern.permute.xlu0 0
    %1656 = vperm.xlu0 %1655, %v1529
    %v1657 = vpop.permute.xlu0 %1656
    %v1658 = vlaneseq
    %v1659 = vshrl.u32 %v1658, 7
    %v1660 = vsub.s32 %v387, %v1659
    %v1661 = vrot.slane %v1564, %v1660
    %v1662 = vlaneseq
    %v1663 = vshrl.u32 %v1662, 7
    %v1664 = vsub.s32 %v392, %v1663
    %v1665 = vrot.slane %v1567, %v1664
    %v1666 = vsel %vm397, %v1665, %v1661
    %v1667 = vlaneseq
    %v1668 = vshrl.u32 %v1667, 7
    %v1669 = vsub.s32 %v399, %v1668
    %v1670 = vrot.slane %v1570, %v1669
    %v1671 = vsel %vm404, %v1670, %v1666
    %v1672 = vlaneseq
    %v1673 = vshrl.u32 %v1672, 7
    %v1674 = vsub.s32 %v406, %v1673
    %v1675 = vrot.slane %v1573, %v1674
    %v1676 = vsel %vm411, %v1675, %v1671
    %v1677 = vlaneseq
    %v1678 = vshrl.u32 %v1677, 7
    %v1679 = vsub.s32 %v413, %v1678
    %v1680 = vrot.slane %v1576, %v1679
    %v1681 = vsel %vm418, %v1680, %v1676
    %v1682 = vlaneseq
    %v1683 = vshrl.u32 %v1682, 7
    %v1684 = vsub.s32 %v420, %v1683
    %v1685 = vrot.slane %v1579, %v1684
    %v1686 = vsel %vm425, %v1685, %v1681
    %v1687 = vlaneseq
    %v1688 = vshrl.u32 %v1687, 7
    %v1689 = vsub.s32 %v427, %v1688
    %v1690 = vrot.slane %v1582, %v1689
    %v1691 = vsel %vm432, %v1690, %v1686
    %v1692 = vlaneseq
    %v1693 = vshrl.u32 %v1692, 7
    %v1694 = vsub.s32 %v434, %v1693
    %v1695 = vrot.slane %v1585, %v1694
    %v1696 = vsel %vm439, %v1695, %v1691
    %v1697 = vlaneseq
    %v1698 = vshrl.u32 %v1697, 7
    %v1699 = vsub.s32 %v441, %v1698
    %v1700 = vrot.slane %v1588, %v1699
    %v1701 = vsel %vm446, %v1700, %v1696
    %v1702 = vlaneseq
    %v1703 = vshrl.u32 %v1702, 7
    %v1704 = vsub.s32 %v448, %v1703
    %v1705 = vrot.slane %v1591, %v1704
    %v1706 = vsel %vm453, %v1705, %v1701
    %v1707 = vlaneseq
    %v1708 = vshrl.u32 %v1707, 7
    %v1709 = vsub.s32 %v455, %v1708
    %v1710 = vrot.slane %v1594, %v1709
    %v1711 = vsel %vm460, %v1710, %v1706
    %v1712 = vlaneseq
    %v1713 = vshrl.u32 %v1712, 7
    %v1714 = vsub.s32 %v462, %v1713
    %v1715 = vrot.slane %v1597, %v1714
    %v1716 = vsel %vm467, %v1715, %v1711
    %v1717 = vlaneseq
    %v1718 = vshrl.u32 %v1717, 7
    %v1719 = vsub.s32 %v469, %v1718
    %v1720 = vrot.slane %v1600, %v1719
    %v1721 = vsel %vm474, %v1720, %v1716
    %v1722 = vlaneseq
    %v1723 = vshrl.u32 %v1722, 7
    %v1724 = vsub.s32 %v476, %v1723
    %v1725 = vrot.slane %v1603, %v1724
    %v1726 = vsel %vm481, %v1725, %v1721
    %v1727 = vlaneseq
    %v1728 = vshrl.u32 %v1727, 7
    %v1729 = vsub.s32 %v483, %v1728
    %v1730 = vrot.slane %v1606, %v1729
    %v1731 = vsel %vm488, %v1730, %v1726
    %v1732 = vlaneseq
    %v1733 = vshrl.u32 %v1732, 7
    %v1734 = vsub.s32 %v490, %v1733
    %v1735 = vrot.slane %v1609, %v1734
    %v1736 = vsel %vm495, %v1735, %v1731
    %v1737 = vlaneseq
    %v1738 = vshrl.u32 %v1737, 7
    %v1739 = vsub.s32 %v387, %v1738
    %v1740 = vrot.slane %v1612, %v1739
    %v1741 = vlaneseq
    %v1742 = vshrl.u32 %v1741, 7
    %v1743 = vsub.s32 %v392, %v1742
    %v1744 = vrot.slane %v1615, %v1743
    %v1745 = vsel %vm397, %v1744, %v1740
    %v1746 = vlaneseq
    %v1747 = vshrl.u32 %v1746, 7
    %v1748 = vsub.s32 %v399, %v1747
    %v1749 = vrot.slane %v1618, %v1748
    %v1750 = vsel %vm404, %v1749, %v1745
    %v1751 = vlaneseq
    %v1752 = vshrl.u32 %v1751, 7
    %v1753 = vsub.s32 %v406, %v1752
    %v1754 = vrot.slane %v1621, %v1753
    %v1755 = vsel %vm411, %v1754, %v1750
    %v1756 = vlaneseq
    %v1757 = vshrl.u32 %v1756, 7
    %v1758 = vsub.s32 %v413, %v1757
    %v1759 = vrot.slane %v1624, %v1758
    %v1760 = vsel %vm418, %v1759, %v1755
    %v1761 = vlaneseq
    %v1762 = vshrl.u32 %v1761, 7
    %v1763 = vsub.s32 %v420, %v1762
    %v1764 = vrot.slane %v1627, %v1763
    %v1765 = vsel %vm425, %v1764, %v1760
    %v1766 = vlaneseq
    %v1767 = vshrl.u32 %v1766, 7
    %v1768 = vsub.s32 %v427, %v1767
    %v1769 = vrot.slane %v1630, %v1768
    %v1770 = vsel %vm432, %v1769, %v1765
    %v1771 = vlaneseq
    %v1772 = vshrl.u32 %v1771, 7
    %v1773 = vsub.s32 %v434, %v1772
    %v1774 = vrot.slane %v1633, %v1773
    %v1775 = vsel %vm439, %v1774, %v1770
    %v1776 = vlaneseq
    %v1777 = vshrl.u32 %v1776, 7
    %v1778 = vsub.s32 %v441, %v1777
    %v1779 = vrot.slane %v1636, %v1778
    %v1780 = vsel %vm446, %v1779, %v1775
    %v1781 = vlaneseq
    %v1782 = vshrl.u32 %v1781, 7
    %v1783 = vsub.s32 %v448, %v1782
    %v1784 = vrot.slane %v1639, %v1783
    %v1785 = vsel %vm453, %v1784, %v1780
    %v1786 = vlaneseq
    %v1787 = vshrl.u32 %v1786, 7
    %v1788 = vsub.s32 %v455, %v1787
    %v1789 = vrot.slane %v1642, %v1788
    %v1790 = vsel %vm460, %v1789, %v1785
    %v1791 = vlaneseq
    %v1792 = vshrl.u32 %v1791, 7
    %v1793 = vsub.s32 %v462, %v1792
    %v1794 = vrot.slane %v1645, %v1793
    %v1795 = vsel %vm467, %v1794, %v1790
    %v1796 = vlaneseq
    %v1797 = vshrl.u32 %v1796, 7
    %v1798 = vsub.s32 %v469, %v1797
    %v1799 = vrot.slane %v1648, %v1798
    %v1800 = vsel %vm474, %v1799, %v1795
    %v1801 = vlaneseq
    %v1802 = vshrl.u32 %v1801, 7
    %v1803 = vsub.s32 %v476, %v1802
    %v1804 = vrot.slane %v1651, %v1803
    %v1805 = vsel %vm481, %v1804, %v1800
    %v1806 = vlaneseq
    %v1807 = vshrl.u32 %v1806, 7
    %v1808 = vsub.s32 %v483, %v1807
    %v1809 = vrot.slane %v1654, %v1808
    %v1810 = vsel %vm488, %v1809, %v1805
    %v1811 = vlaneseq
    %v1812 = vshrl.u32 %v1811, 7
    %v1813 = vsub.s32 %v490, %v1812
    %v1814 = vrot.slane %v1657, %v1813
    %v1815 = vsel %vm495, %v1814, %v1810
    %v1816 = vsel %vm576, %v1815, %v1736
    %v1818 = vadd.f32 %v1405, %v1816
    %v1819 = vlaneseq
    %v1820 = vshrl.u32 %v1819, 7
    %v1821 = vsub.s32 4, %v1820
    %v1822 = vrot.slane %v124, %v1821
    %v1823 = vlaneseq
    %v1824 = vshrl.u32 %v1823, 7
    %v1825 = vsub.s32 4, %v1824
    %v1826 = vrot.slane %v125, %v1825
    %v1827 = vlaneseq
    %v1828 = vshrl.u32 %v1827, 7
    %v1829 = vsub.s32 4, %v1828
    %v1830 = vrot.slane %v126, %v1829
    %1833 = vbcast.lane.b32.xlu0 %v1830, 256
    %v1834 = vpop.permute.xlu0 %1833
    %s1836 = sor.u32 256, 8
    %1837 = vbcast.lane.b32.xlu0 %v1830, %s1836
    %v1838 = vpop.permute.xlu0 %1837
    %s1840 = sor.u32 256, 16
    %1841 = vbcast.lane.b32.xlu0 %v1830, %s1840
    %v1842 = vpop.permute.xlu0 %1841
    %s1844 = sor.u32 256, 24
    %1845 = vbcast.lane.b32.xlu0 %v1830, %s1844
    %v1846 = vpop.permute.xlu0 %1845
    %s1848 = sor.u32 256, 32
    %1849 = vbcast.lane.b32.xlu0 %v1830, %s1848
    %v1850 = vpop.permute.xlu0 %1849
    %s1852 = sor.u32 256, 40
    %1853 = vbcast.lane.b32.xlu0 %v1830, %s1852
    %v1854 = vpop.permute.xlu0 %1853
    %s1856 = sor.u32 256, 48
    %1857 = vbcast.lane.b32.xlu0 %v1830, %s1856
    %v1858 = vpop.permute.xlu0 %1857
    %s1860 = sor.u32 256, 56
    %1861 = vbcast.lane.b32.xlu0 %v1830, %s1860
    %v1862 = vpop.permute.xlu0 %1861
    %s1864 = sor.u32 256, 64
    %1865 = vbcast.lane.b32.xlu0 %v1830, %s1864
    %v1866 = vpop.permute.xlu0 %1865
    %s1868 = sor.u32 256, 72
    %1869 = vbcast.lane.b32.xlu0 %v1830, %s1868
    %v1870 = vpop.permute.xlu0 %1869
    %s1872 = sor.u32 256, 80
    %1873 = vbcast.lane.b32.xlu0 %v1830, %s1872
    %v1874 = vpop.permute.xlu0 %1873
    %s1876 = sor.u32 256, 88
    %1877 = vbcast.lane.b32.xlu0 %v1830, %s1876
    %v1878 = vpop.permute.xlu0 %1877
    %s1880 = sor.u32 256, 96
    %1881 = vbcast.lane.b32.xlu0 %v1830, %s1880
    %v1882 = vpop.permute.xlu0 %1881
    %s1884 = sor.u32 256, 104
    %1885 = vbcast.lane.b32.xlu0 %v1830, %s1884
    %v1886 = vpop.permute.xlu0 %1885
    %s1888 = sor.u32 256, 112
    %1889 = vbcast.lane.b32.xlu0 %v1830, %s1888
    %v1890 = vpop.permute.xlu0 %1889
    %s1892 = sor.u32 256, 120
    %1893 = vbcast.lane.b32.xlu0 %v1830, %s1892
    %v1894 = vpop.permute.xlu0 %1893
    %v1911 = vmul.f32 %v1822, %v1834
    %v1912 = vmul.f32 %v1822, %v1838
    %v1913 = vmul.f32 %v1822, %v1842
    %v1914 = vmul.f32 %v1822, %v1846
    %v1915 = vmul.f32 %v1822, %v1850
    %v1916 = vmul.f32 %v1822, %v1854
    %v1917 = vmul.f32 %v1822, %v1858
    %v1918 = vmul.f32 %v1822, %v1862
    %v1919 = vmul.f32 %v1822, %v1866
    %v1920 = vmul.f32 %v1822, %v1870
    %v1921 = vmul.f32 %v1822, %v1874
    %v1922 = vmul.f32 %v1822, %v1878
    %v1923 = vmul.f32 %v1822, %v1882
    %v1924 = vmul.f32 %v1822, %v1886
    %v1925 = vmul.f32 %v1822, %v1890
    %v1926 = vmul.f32 %v1822, %v1894
    %v1927 = vmul.f32 %v1826, %v1834
    %v1928 = vmul.f32 %v1826, %v1838
    %v1929 = vmul.f32 %v1826, %v1842
    %v1930 = vmul.f32 %v1826, %v1846
    %v1931 = vmul.f32 %v1826, %v1850
    %v1932 = vmul.f32 %v1826, %v1854
    %v1933 = vmul.f32 %v1826, %v1858
    %v1934 = vmul.f32 %v1826, %v1862
    %v1935 = vmul.f32 %v1826, %v1866
    %v1936 = vmul.f32 %v1826, %v1870
    %v1937 = vmul.f32 %v1826, %v1874
    %v1938 = vmul.f32 %v1826, %v1878
    %v1939 = vmul.f32 %v1826, %v1882
    %v1940 = vmul.f32 %v1826, %v1886
    %v1941 = vmul.f32 %v1826, %v1890
    %v1942 = vmul.f32 %v1826, %v1894
    %1975 = vset.pattern.permute.xlu0 0
    %1976 = vperm.xlu0 %1975, %v1911
    %v1977 = vpop.permute.xlu0 %1976
    %1978 = vset.pattern.permute.xlu0 0
    %1979 = vperm.xlu0 %1978, %v1912
    %v1980 = vpop.permute.xlu0 %1979
    %1981 = vset.pattern.permute.xlu0 0
    %1982 = vperm.xlu0 %1981, %v1913
    %v1983 = vpop.permute.xlu0 %1982
    %1984 = vset.pattern.permute.xlu0 0
    %1985 = vperm.xlu0 %1984, %v1914
    %v1986 = vpop.permute.xlu0 %1985
    %1987 = vset.pattern.permute.xlu0 0
    %1988 = vperm.xlu0 %1987, %v1915
    %v1989 = vpop.permute.xlu0 %1988
    %1990 = vset.pattern.permute.xlu0 0
    %1991 = vperm.xlu0 %1990, %v1916
    %v1992 = vpop.permute.xlu0 %1991
    %1993 = vset.pattern.permute.xlu0 0
    %1994 = vperm.xlu0 %1993, %v1917
    %v1995 = vpop.permute.xlu0 %1994
    %1996 = vset.pattern.permute.xlu0 0
    %1997 = vperm.xlu0 %1996, %v1918
    %v1998 = vpop.permute.xlu0 %1997
    %1999 = vset.pattern.permute.xlu0 0
    %2000 = vperm.xlu0 %1999, %v1919
    %v2001 = vpop.permute.xlu0 %2000
    %2002 = vset.pattern.permute.xlu0 0
    %2003 = vperm.xlu0 %2002, %v1920
    %v2004 = vpop.permute.xlu0 %2003
    %2005 = vset.pattern.permute.xlu0 0
    %2006 = vperm.xlu0 %2005, %v1921
    %v2007 = vpop.permute.xlu0 %2006
    %2008 = vset.pattern.permute.xlu0 0
    %2009 = vperm.xlu0 %2008, %v1922
    %v2010 = vpop.permute.xlu0 %2009
    %2011 = vset.pattern.permute.xlu0 0
    %2012 = vperm.xlu0 %2011, %v1923
    %v2013 = vpop.permute.xlu0 %2012
    %2014 = vset.pattern.permute.xlu0 0
    %2015 = vperm.xlu0 %2014, %v1924
    %v2016 = vpop.permute.xlu0 %2015
    %2017 = vset.pattern.permute.xlu0 0
    %2018 = vperm.xlu0 %2017, %v1925
    %v2019 = vpop.permute.xlu0 %2018
    %2020 = vset.pattern.permute.xlu0 0
    %2021 = vperm.xlu0 %2020, %v1926
    %v2022 = vpop.permute.xlu0 %2021
    %2023 = vset.pattern.permute.xlu0 0
    %2024 = vperm.xlu0 %2023, %v1927
    %v2025 = vpop.permute.xlu0 %2024
    %2026 = vset.pattern.permute.xlu0 0
    %2027 = vperm.xlu0 %2026, %v1928
    %v2028 = vpop.permute.xlu0 %2027
    %2029 = vset.pattern.permute.xlu0 0
    %2030 = vperm.xlu0 %2029, %v1929
    %v2031 = vpop.permute.xlu0 %2030
    %2032 = vset.pattern.permute.xlu0 0
    %2033 = vperm.xlu0 %2032, %v1930
    %v2034 = vpop.permute.xlu0 %2033
    %2035 = vset.pattern.permute.xlu0 0
    %2036 = vperm.xlu0 %2035, %v1931
    %v2037 = vpop.permute.xlu0 %2036
    %2038 = vset.pattern.permute.xlu0 0
    %2039 = vperm.xlu0 %2038, %v1932
    %v2040 = vpop.permute.xlu0 %2039
    %2041 = vset.pattern.permute.xlu0 0
    %2042 = vperm.xlu0 %2041, %v1933
    %v2043 = vpop.permute.xlu0 %2042
    %2044 = vset.pattern.permute.xlu0 0
    %2045 = vperm.xlu0 %2044, %v1934
    %v2046 = vpop.permute.xlu0 %2045
    %2047 = vset.pattern.permute.xlu0 0
    %2048 = vperm.xlu0 %2047, %v1935
    %v2049 = vpop.permute.xlu0 %2048
    %2050 = vset.pattern.permute.xlu0 0
    %2051 = vperm.xlu0 %2050, %v1936
    %v2052 = vpop.permute.xlu0 %2051
    %2053 = vset.pattern.permute.xlu0 0
    %2054 = vperm.xlu0 %2053, %v1937
    %v2055 = vpop.permute.xlu0 %2054
    %2056 = vset.pattern.permute.xlu0 0
    %2057 = vperm.xlu0 %2056, %v1938
    %v2058 = vpop.permute.xlu0 %2057
    %2059 = vset.pattern.permute.xlu0 0
    %2060 = vperm.xlu0 %2059, %v1939
    %v2061 = vpop.permute.xlu0 %2060
    %2062 = vset.pattern.permute.xlu0 0
    %2063 = vperm.xlu0 %2062, %v1940
    %v2064 = vpop.permute.xlu0 %2063
    %2065 = vset.pattern.permute.xlu0 0
    %2066 = vperm.xlu0 %2065, %v1941
    %v2067 = vpop.permute.xlu0 %2066
    %2068 = vset.pattern.permute.xlu0 0
    %2069 = vperm.xlu0 %2068, %v1942
    %v2070 = vpop.permute.xlu0 %2069
    %v2071 = vlaneseq
    %v2072 = vshrl.u32 %v2071, 7
    %v2073 = vsub.s32 %v387, %v2072
    %v2074 = vrot.slane %v1977, %v2073
    %v2075 = vlaneseq
    %v2076 = vshrl.u32 %v2075, 7
    %v2077 = vsub.s32 %v392, %v2076
    %v2078 = vrot.slane %v1980, %v2077
    %v2079 = vsel %vm397, %v2078, %v2074
    %v2080 = vlaneseq
    %v2081 = vshrl.u32 %v2080, 7
    %v2082 = vsub.s32 %v399, %v2081
    %v2083 = vrot.slane %v1983, %v2082
    %v2084 = vsel %vm404, %v2083, %v2079
    %v2085 = vlaneseq
    %v2086 = vshrl.u32 %v2085, 7
    %v2087 = vsub.s32 %v406, %v2086
    %v2088 = vrot.slane %v1986, %v2087
    %v2089 = vsel %vm411, %v2088, %v2084
    %v2090 = vlaneseq
    %v2091 = vshrl.u32 %v2090, 7
    %v2092 = vsub.s32 %v413, %v2091
    %v2093 = vrot.slane %v1989, %v2092
    %v2094 = vsel %vm418, %v2093, %v2089
    %v2095 = vlaneseq
    %v2096 = vshrl.u32 %v2095, 7
    %v2097 = vsub.s32 %v420, %v2096
    %v2098 = vrot.slane %v1992, %v2097
    %v2099 = vsel %vm425, %v2098, %v2094
    %v2100 = vlaneseq
    %v2101 = vshrl.u32 %v2100, 7
    %v2102 = vsub.s32 %v427, %v2101
    %v2103 = vrot.slane %v1995, %v2102
    %v2104 = vsel %vm432, %v2103, %v2099
    %v2105 = vlaneseq
    %v2106 = vshrl.u32 %v2105, 7
    %v2107 = vsub.s32 %v434, %v2106
    %v2108 = vrot.slane %v1998, %v2107
    %v2109 = vsel %vm439, %v2108, %v2104
    %v2110 = vlaneseq
    %v2111 = vshrl.u32 %v2110, 7
    %v2112 = vsub.s32 %v441, %v2111
    %v2113 = vrot.slane %v2001, %v2112
    %v2114 = vsel %vm446, %v2113, %v2109
    %v2115 = vlaneseq
    %v2116 = vshrl.u32 %v2115, 7
    %v2117 = vsub.s32 %v448, %v2116
    %v2118 = vrot.slane %v2004, %v2117
    %v2119 = vsel %vm453, %v2118, %v2114
    %v2120 = vlaneseq
    %v2121 = vshrl.u32 %v2120, 7
    %v2122 = vsub.s32 %v455, %v2121
    %v2123 = vrot.slane %v2007, %v2122
    %v2124 = vsel %vm460, %v2123, %v2119
    %v2125 = vlaneseq
    %v2126 = vshrl.u32 %v2125, 7
    %v2127 = vsub.s32 %v462, %v2126
    %v2128 = vrot.slane %v2010, %v2127
    %v2129 = vsel %vm467, %v2128, %v2124
    %v2130 = vlaneseq
    %v2131 = vshrl.u32 %v2130, 7
    %v2132 = vsub.s32 %v469, %v2131
    %v2133 = vrot.slane %v2013, %v2132
    %v2134 = vsel %vm474, %v2133, %v2129
    %v2135 = vlaneseq
    %v2136 = vshrl.u32 %v2135, 7
    %v2137 = vsub.s32 %v476, %v2136
    %v2138 = vrot.slane %v2016, %v2137
    %v2139 = vsel %vm481, %v2138, %v2134
    %v2140 = vlaneseq
    %v2141 = vshrl.u32 %v2140, 7
    %v2142 = vsub.s32 %v483, %v2141
    %v2143 = vrot.slane %v2019, %v2142
    %v2144 = vsel %vm488, %v2143, %v2139
    %v2145 = vlaneseq
    %v2146 = vshrl.u32 %v2145, 7
    %v2147 = vsub.s32 %v490, %v2146
    %v2148 = vrot.slane %v2022, %v2147
    %v2149 = vsel %vm495, %v2148, %v2144
    %v2150 = vlaneseq
    %v2151 = vshrl.u32 %v2150, 7
    %v2152 = vsub.s32 %v387, %v2151
    %v2153 = vrot.slane %v2025, %v2152
    %v2154 = vlaneseq
    %v2155 = vshrl.u32 %v2154, 7
    %v2156 = vsub.s32 %v392, %v2155
    %v2157 = vrot.slane %v2028, %v2156
    %v2158 = vsel %vm397, %v2157, %v2153
    %v2159 = vlaneseq
    %v2160 = vshrl.u32 %v2159, 7
    %v2161 = vsub.s32 %v399, %v2160
    %v2162 = vrot.slane %v2031, %v2161
    %v2163 = vsel %vm404, %v2162, %v2158
    %v2164 = vlaneseq
    %v2165 = vshrl.u32 %v2164, 7
    %v2166 = vsub.s32 %v406, %v2165
    %v2167 = vrot.slane %v2034, %v2166
    %v2168 = vsel %vm411, %v2167, %v2163
    %v2169 = vlaneseq
    %v2170 = vshrl.u32 %v2169, 7
    %v2171 = vsub.s32 %v413, %v2170
    %v2172 = vrot.slane %v2037, %v2171
    %v2173 = vsel %vm418, %v2172, %v2168
    %v2174 = vlaneseq
    %v2175 = vshrl.u32 %v2174, 7
    %v2176 = vsub.s32 %v420, %v2175
    %v2177 = vrot.slane %v2040, %v2176
    %v2178 = vsel %vm425, %v2177, %v2173
    %v2179 = vlaneseq
    %v2180 = vshrl.u32 %v2179, 7
    %v2181 = vsub.s32 %v427, %v2180
    %v2182 = vrot.slane %v2043, %v2181
    %v2183 = vsel %vm432, %v2182, %v2178
    %v2184 = vlaneseq
    %v2185 = vshrl.u32 %v2184, 7
    %v2186 = vsub.s32 %v434, %v2185
    %v2187 = vrot.slane %v2046, %v2186
    %v2188 = vsel %vm439, %v2187, %v2183
    %v2189 = vlaneseq
    %v2190 = vshrl.u32 %v2189, 7
    %v2191 = vsub.s32 %v441, %v2190
    %v2192 = vrot.slane %v2049, %v2191
    %v2193 = vsel %vm446, %v2192, %v2188
    %v2194 = vlaneseq
    %v2195 = vshrl.u32 %v2194, 7
    %v2196 = vsub.s32 %v448, %v2195
    %v2197 = vrot.slane %v2052, %v2196
    %v2198 = vsel %vm453, %v2197, %v2193
    %v2199 = vlaneseq
    %v2200 = vshrl.u32 %v2199, 7
    %v2201 = vsub.s32 %v455, %v2200
    %v2202 = vrot.slane %v2055, %v2201
    %v2203 = vsel %vm460, %v2202, %v2198
    %v2204 = vlaneseq
    %v2205 = vshrl.u32 %v2204, 7
    %v2206 = vsub.s32 %v462, %v2205
    %v2207 = vrot.slane %v2058, %v2206
    %v2208 = vsel %vm467, %v2207, %v2203
    %v2209 = vlaneseq
    %v2210 = vshrl.u32 %v2209, 7
    %v2211 = vsub.s32 %v469, %v2210
    %v2212 = vrot.slane %v2061, %v2211
    %v2213 = vsel %vm474, %v2212, %v2208
    %v2214 = vlaneseq
    %v2215 = vshrl.u32 %v2214, 7
    %v2216 = vsub.s32 %v476, %v2215
    %v2217 = vrot.slane %v2064, %v2216
    %v2218 = vsel %vm481, %v2217, %v2213
    %v2219 = vlaneseq
    %v2220 = vshrl.u32 %v2219, 7
    %v2221 = vsub.s32 %v483, %v2220
    %v2222 = vrot.slane %v2067, %v2221
    %v2223 = vsel %vm488, %v2222, %v2218
    %v2224 = vlaneseq
    %v2225 = vshrl.u32 %v2224, 7
    %v2226 = vsub.s32 %v490, %v2225
    %v2227 = vrot.slane %v2070, %v2226
    %v2228 = vsel %vm495, %v2227, %v2223
    %v2229 = vsel %vm576, %v2228, %v2149
    %v2231 = vadd.f32 %v1818, %v2229
    %v2232 = vlaneseq
    %v2233 = vshrl.u32 %v2232, 7
    %v2234 = vsub.s32 5, %v2233
    %v2235 = vrot.slane %v124, %v2234
    %v2236 = vlaneseq
    %v2237 = vshrl.u32 %v2236, 7
    %v2238 = vsub.s32 5, %v2237
    %v2239 = vrot.slane %v125, %v2238
    %v2240 = vlaneseq
    %v2241 = vshrl.u32 %v2240, 7
    %v2242 = vsub.s32 5, %v2241
    %v2243 = vrot.slane %v126, %v2242
    %2246 = vbcast.lane.b32.xlu0 %v2243, 256
    %v2247 = vpop.permute.xlu0 %2246
    %s2249 = sor.u32 256, 8
    %2250 = vbcast.lane.b32.xlu0 %v2243, %s2249
    %v2251 = vpop.permute.xlu0 %2250
    %s2253 = sor.u32 256, 16
    %2254 = vbcast.lane.b32.xlu0 %v2243, %s2253
    %v2255 = vpop.permute.xlu0 %2254
    %s2257 = sor.u32 256, 24
    %2258 = vbcast.lane.b32.xlu0 %v2243, %s2257
    %v2259 = vpop.permute.xlu0 %2258
    %s2261 = sor.u32 256, 32
    %2262 = vbcast.lane.b32.xlu0 %v2243, %s2261
    %v2263 = vpop.permute.xlu0 %2262
    %s2265 = sor.u32 256, 40
    %2266 = vbcast.lane.b32.xlu0 %v2243, %s2265
    %v2267 = vpop.permute.xlu0 %2266
    %s2269 = sor.u32 256, 48
    %2270 = vbcast.lane.b32.xlu0 %v2243, %s2269
    %v2271 = vpop.permute.xlu0 %2270
    %s2273 = sor.u32 256, 56
    %2274 = vbcast.lane.b32.xlu0 %v2243, %s2273
    %v2275 = vpop.permute.xlu0 %2274
    %s2277 = sor.u32 256, 64
    %2278 = vbcast.lane.b32.xlu0 %v2243, %s2277
    %v2279 = vpop.permute.xlu0 %2278
    %s2281 = sor.u32 256, 72
    %2282 = vbcast.lane.b32.xlu0 %v2243, %s2281
    %v2283 = vpop.permute.xlu0 %2282
    %s2285 = sor.u32 256, 80
    %2286 = vbcast.lane.b32.xlu0 %v2243, %s2285
    %v2287 = vpop.permute.xlu0 %2286
    %s2289 = sor.u32 256, 88
    %2290 = vbcast.lane.b32.xlu0 %v2243, %s2289
    %v2291 = vpop.permute.xlu0 %2290
    %s2293 = sor.u32 256, 96
    %2294 = vbcast.lane.b32.xlu0 %v2243, %s2293
    %v2295 = vpop.permute.xlu0 %2294
    %s2297 = sor.u32 256, 104
    %2298 = vbcast.lane.b32.xlu0 %v2243, %s2297
    %v2299 = vpop.permute.xlu0 %2298
    %s2301 = sor.u32 256, 112
    %2302 = vbcast.lane.b32.xlu0 %v2243, %s2301
    %v2303 = vpop.permute.xlu0 %2302
    %s2305 = sor.u32 256, 120
    %2306 = vbcast.lane.b32.xlu0 %v2243, %s2305
    %v2307 = vpop.permute.xlu0 %2306
    %v2324 = vmul.f32 %v2235, %v2247
    %v2325 = vmul.f32 %v2235, %v2251
    %v2326 = vmul.f32 %v2235, %v2255
    %v2327 = vmul.f32 %v2235, %v2259
    %v2328 = vmul.f32 %v2235, %v2263
    %v2329 = vmul.f32 %v2235, %v2267
    %v2330 = vmul.f32 %v2235, %v2271
    %v2331 = vmul.f32 %v2235, %v2275
    %v2332 = vmul.f32 %v2235, %v2279
    %v2333 = vmul.f32 %v2235, %v2283
    %v2334 = vmul.f32 %v2235, %v2287
    %v2335 = vmul.f32 %v2235, %v2291
    %v2336 = vmul.f32 %v2235, %v2295
    %v2337 = vmul.f32 %v2235, %v2299
    %v2338 = vmul.f32 %v2235, %v2303
    %v2339 = vmul.f32 %v2235, %v2307
    %v2340 = vmul.f32 %v2239, %v2247
    %v2341 = vmul.f32 %v2239, %v2251
    %v2342 = vmul.f32 %v2239, %v2255
    %v2343 = vmul.f32 %v2239, %v2259
    %v2344 = vmul.f32 %v2239, %v2263
    %v2345 = vmul.f32 %v2239, %v2267
    %v2346 = vmul.f32 %v2239, %v2271
    %v2347 = vmul.f32 %v2239, %v2275
    %v2348 = vmul.f32 %v2239, %v2279
    %v2349 = vmul.f32 %v2239, %v2283
    %v2350 = vmul.f32 %v2239, %v2287
    %v2351 = vmul.f32 %v2239, %v2291
    %v2352 = vmul.f32 %v2239, %v2295
    %v2353 = vmul.f32 %v2239, %v2299
    %v2354 = vmul.f32 %v2239, %v2303
    %v2355 = vmul.f32 %v2239, %v2307
    %2388 = vset.pattern.permute.xlu0 0
    %2389 = vperm.xlu0 %2388, %v2324
    %v2390 = vpop.permute.xlu0 %2389
    %2391 = vset.pattern.permute.xlu0 0
    %2392 = vperm.xlu0 %2391, %v2325
    %v2393 = vpop.permute.xlu0 %2392
    %2394 = vset.pattern.permute.xlu0 0
    %2395 = vperm.xlu0 %2394, %v2326
    %v2396 = vpop.permute.xlu0 %2395
    %2397 = vset.pattern.permute.xlu0 0
    %2398 = vperm.xlu0 %2397, %v2327
    %v2399 = vpop.permute.xlu0 %2398
    %2400 = vset.pattern.permute.xlu0 0
    %2401 = vperm.xlu0 %2400, %v2328
    %v2402 = vpop.permute.xlu0 %2401
    %2403 = vset.pattern.permute.xlu0 0
    %2404 = vperm.xlu0 %2403, %v2329
    %v2405 = vpop.permute.xlu0 %2404
    %2406 = vset.pattern.permute.xlu0 0
    %2407 = vperm.xlu0 %2406, %v2330
    %v2408 = vpop.permute.xlu0 %2407
    %2409 = vset.pattern.permute.xlu0 0
    %2410 = vperm.xlu0 %2409, %v2331
    %v2411 = vpop.permute.xlu0 %2410
    %2412 = vset.pattern.permute.xlu0 0
    %2413 = vperm.xlu0 %2412, %v2332
    %v2414 = vpop.permute.xlu0 %2413
    %2415 = vset.pattern.permute.xlu0 0
    %2416 = vperm.xlu0 %2415, %v2333
    %v2417 = vpop.permute.xlu0 %2416
    %2418 = vset.pattern.permute.xlu0 0
    %2419 = vperm.xlu0 %2418, %v2334
    %v2420 = vpop.permute.xlu0 %2419
    %2421 = vset.pattern.permute.xlu0 0
    %2422 = vperm.xlu0 %2421, %v2335
    %v2423 = vpop.permute.xlu0 %2422
    %2424 = vset.pattern.permute.xlu0 0
    %2425 = vperm.xlu0 %2424, %v2336
    %v2426 = vpop.permute.xlu0 %2425
    %2427 = vset.pattern.permute.xlu0 0
    %2428 = vperm.xlu0 %2427, %v2337
    %v2429 = vpop.permute.xlu0 %2428
    %2430 = vset.pattern.permute.xlu0 0
    %2431 = vperm.xlu0 %2430, %v2338
    %v2432 = vpop.permute.xlu0 %2431
    %2433 = vset.pattern.permute.xlu0 0
    %2434 = vperm.xlu0 %2433, %v2339
    %v2435 = vpop.permute.xlu0 %2434
    %2436 = vset.pattern.permute.xlu0 0
    %2437 = vperm.xlu0 %2436, %v2340
    %v2438 = vpop.permute.xlu0 %2437
    %2439 = vset.pattern.permute.xlu0 0
    %2440 = vperm.xlu0 %2439, %v2341
    %v2441 = vpop.permute.xlu0 %2440
    %2442 = vset.pattern.permute.xlu0 0
    %2443 = vperm.xlu0 %2442, %v2342
    %v2444 = vpop.permute.xlu0 %2443
    %2445 = vset.pattern.permute.xlu0 0
    %2446 = vperm.xlu0 %2445, %v2343
    %v2447 = vpop.permute.xlu0 %2446
    %2448 = vset.pattern.permute.xlu0 0
    %2449 = vperm.xlu0 %2448, %v2344
    %v2450 = vpop.permute.xlu0 %2449
    %2451 = vset.pattern.permute.xlu0 0
    %2452 = vperm.xlu0 %2451, %v2345
    %v2453 = vpop.permute.xlu0 %2452
    %2454 = vset.pattern.permute.xlu0 0
    %2455 = vperm.xlu0 %2454, %v2346
    %v2456 = vpop.permute.xlu0 %2455
    %2457 = vset.pattern.permute.xlu0 0
    %2458 = vperm.xlu0 %2457, %v2347
    %v2459 = vpop.permute.xlu0 %2458
    %2460 = vset.pattern.permute.xlu0 0
    %2461 = vperm.xlu0 %2460, %v2348
    %v2462 = vpop.permute.xlu0 %2461
    %2463 = vset.pattern.permute.xlu0 0
    %2464 = vperm.xlu0 %2463, %v2349
    %v2465 = vpop.permute.xlu0 %2464
    %2466 = vset.pattern.permute.xlu0 0
    %2467 = vperm.xlu0 %2466, %v2350
    %v2468 = vpop.permute.xlu0 %2467
    %2469 = vset.pattern.permute.xlu0 0
    %2470 = vperm.xlu0 %2469, %v2351
    %v2471 = vpop.permute.xlu0 %2470
    %2472 = vset.pattern.permute.xlu0 0
    %2473 = vperm.xlu0 %2472, %v2352
    %v2474 = vpop.permute.xlu0 %2473
    %2475 = vset.pattern.permute.xlu0 0
    %2476 = vperm.xlu0 %2475, %v2353
    %v2477 = vpop.permute.xlu0 %2476
    %2478 = vset.pattern.permute.xlu0 0
    %2479 = vperm.xlu0 %2478, %v2354
    %v2480 = vpop.permute.xlu0 %2479
    %2481 = vset.pattern.permute.xlu0 0
    %2482 = vperm.xlu0 %2481, %v2355
    %v2483 = vpop.permute.xlu0 %2482
    %v2484 = vlaneseq
    %v2485 = vshrl.u32 %v2484, 7
    %v2486 = vsub.s32 %v387, %v2485
    %v2487 = vrot.slane %v2390, %v2486
    %v2488 = vlaneseq
    %v2489 = vshrl.u32 %v2488, 7
    %v2490 = vsub.s32 %v392, %v2489
    %v2491 = vrot.slane %v2393, %v2490
    %v2492 = vsel %vm397, %v2491, %v2487
    %v2493 = vlaneseq
    %v2494 = vshrl.u32 %v2493, 7
    %v2495 = vsub.s32 %v399, %v2494
    %v2496 = vrot.slane %v2396, %v2495
    %v2497 = vsel %vm404, %v2496, %v2492
    %v2498 = vlaneseq
    %v2499 = vshrl.u32 %v2498, 7
    %v2500 = vsub.s32 %v406, %v2499
    %v2501 = vrot.slane %v2399, %v2500
    %v2502 = vsel %vm411, %v2501, %v2497
    %v2503 = vlaneseq
    %v2504 = vshrl.u32 %v2503, 7
    %v2505 = vsub.s32 %v413, %v2504
    %v2506 = vrot.slane %v2402, %v2505
    %v2507 = vsel %vm418, %v2506, %v2502
    %v2508 = vlaneseq
    %v2509 = vshrl.u32 %v2508, 7
    %v2510 = vsub.s32 %v420, %v2509
    %v2511 = vrot.slane %v2405, %v2510
    %v2512 = vsel %vm425, %v2511, %v2507
    %v2513 = vlaneseq
    %v2514 = vshrl.u32 %v2513, 7
    %v2515 = vsub.s32 %v427, %v2514
    %v2516 = vrot.slane %v2408, %v2515
    %v2517 = vsel %vm432, %v2516, %v2512
    %v2518 = vlaneseq
    %v2519 = vshrl.u32 %v2518, 7
    %v2520 = vsub.s32 %v434, %v2519
    %v2521 = vrot.slane %v2411, %v2520
    %v2522 = vsel %vm439, %v2521, %v2517
    %v2523 = vlaneseq
    %v2524 = vshrl.u32 %v2523, 7
    %v2525 = vsub.s32 %v441, %v2524
    %v2526 = vrot.slane %v2414, %v2525
    %v2527 = vsel %vm446, %v2526, %v2522
    %v2528 = vlaneseq
    %v2529 = vshrl.u32 %v2528, 7
    %v2530 = vsub.s32 %v448, %v2529
    %v2531 = vrot.slane %v2417, %v2530
    %v2532 = vsel %vm453, %v2531, %v2527
    %v2533 = vlaneseq
    %v2534 = vshrl.u32 %v2533, 7
    %v2535 = vsub.s32 %v455, %v2534
    %v2536 = vrot.slane %v2420, %v2535
    %v2537 = vsel %vm460, %v2536, %v2532
    %v2538 = vlaneseq
    %v2539 = vshrl.u32 %v2538, 7
    %v2540 = vsub.s32 %v462, %v2539
    %v2541 = vrot.slane %v2423, %v2540
    %v2542 = vsel %vm467, %v2541, %v2537
    %v2543 = vlaneseq
    %v2544 = vshrl.u32 %v2543, 7
    %v2545 = vsub.s32 %v469, %v2544
    %v2546 = vrot.slane %v2426, %v2545
    %v2547 = vsel %vm474, %v2546, %v2542
    %v2548 = vlaneseq
    %v2549 = vshrl.u32 %v2548, 7
    %v2550 = vsub.s32 %v476, %v2549
    %v2551 = vrot.slane %v2429, %v2550
    %v2552 = vsel %vm481, %v2551, %v2547
    %v2553 = vlaneseq
    %v2554 = vshrl.u32 %v2553, 7
    %v2555 = vsub.s32 %v483, %v2554
    %v2556 = vrot.slane %v2432, %v2555
    %v2557 = vsel %vm488, %v2556, %v2552
    %v2558 = vlaneseq
    %v2559 = vshrl.u32 %v2558, 7
    %v2560 = vsub.s32 %v490, %v2559
    %v2561 = vrot.slane %v2435, %v2560
    %v2562 = vsel %vm495, %v2561, %v2557
    %v2563 = vlaneseq
    %v2564 = vshrl.u32 %v2563, 7
    %v2565 = vsub.s32 %v387, %v2564
    %v2566 = vrot.slane %v2438, %v2565
    %v2567 = vlaneseq
    %v2568 = vshrl.u32 %v2567, 7
    %v2569 = vsub.s32 %v392, %v2568
    %v2570 = vrot.slane %v2441, %v2569
    %v2571 = vsel %vm397, %v2570, %v2566
    %v2572 = vlaneseq
    %v2573 = vshrl.u32 %v2572, 7
    %v2574 = vsub.s32 %v399, %v2573
    %v2575 = vrot.slane %v2444, %v2574
    %v2576 = vsel %vm404, %v2575, %v2571
    %v2577 = vlaneseq
    %v2578 = vshrl.u32 %v2577, 7
    %v2579 = vsub.s32 %v406, %v2578
    %v2580 = vrot.slane %v2447, %v2579
    %v2581 = vsel %vm411, %v2580, %v2576
    %v2582 = vlaneseq
    %v2583 = vshrl.u32 %v2582, 7
    %v2584 = vsub.s32 %v413, %v2583
    %v2585 = vrot.slane %v2450, %v2584
    %v2586 = vsel %vm418, %v2585, %v2581
    %v2587 = vlaneseq
    %v2588 = vshrl.u32 %v2587, 7
    %v2589 = vsub.s32 %v420, %v2588
    %v2590 = vrot.slane %v2453, %v2589
    %v2591 = vsel %vm425, %v2590, %v2586
    %v2592 = vlaneseq
    %v2593 = vshrl.u32 %v2592, 7
    %v2594 = vsub.s32 %v427, %v2593
    %v2595 = vrot.slane %v2456, %v2594
    %v2596 = vsel %vm432, %v2595, %v2591
    %v2597 = vlaneseq
    %v2598 = vshrl.u32 %v2597, 7
    %v2599 = vsub.s32 %v434, %v2598
    %v2600 = vrot.slane %v2459, %v2599
    %v2601 = vsel %vm439, %v2600, %v2596
    %v2602 = vlaneseq
    %v2603 = vshrl.u32 %v2602, 7
    %v2604 = vsub.s32 %v441, %v2603
    %v2605 = vrot.slane %v2462, %v2604
    %v2606 = vsel %vm446, %v2605, %v2601
    %v2607 = vlaneseq
    %v2608 = vshrl.u32 %v2607, 7
    %v2609 = vsub.s32 %v448, %v2608
    %v2610 = vrot.slane %v2465, %v2609
    %v2611 = vsel %vm453, %v2610, %v2606
    %v2612 = vlaneseq
    %v2613 = vshrl.u32 %v2612, 7
    %v2614 = vsub.s32 %v455, %v2613
    %v2615 = vrot.slane %v2468, %v2614
    %v2616 = vsel %vm460, %v2615, %v2611
    %v2617 = vlaneseq
    %v2618 = vshrl.u32 %v2617, 7
    %v2619 = vsub.s32 %v462, %v2618
    %v2620 = vrot.slane %v2471, %v2619
    %v2621 = vsel %vm467, %v2620, %v2616
    %v2622 = vlaneseq
    %v2623 = vshrl.u32 %v2622, 7
    %v2624 = vsub.s32 %v469, %v2623
    %v2625 = vrot.slane %v2474, %v2624
    %v2626 = vsel %vm474, %v2625, %v2621
    %v2627 = vlaneseq
    %v2628 = vshrl.u32 %v2627, 7
    %v2629 = vsub.s32 %v476, %v2628
    %v2630 = vrot.slane %v2477, %v2629
    %v2631 = vsel %vm481, %v2630, %v2626
    %v2632 = vlaneseq
    %v2633 = vshrl.u32 %v2632, 7
    %v2634 = vsub.s32 %v483, %v2633
    %v2635 = vrot.slane %v2480, %v2634
    %v2636 = vsel %vm488, %v2635, %v2631
    %v2637 = vlaneseq
    %v2638 = vshrl.u32 %v2637, 7
    %v2639 = vsub.s32 %v490, %v2638
    %v2640 = vrot.slane %v2483, %v2639
    %v2641 = vsel %vm495, %v2640, %v2636
    %v2642 = vsel %vm576, %v2641, %v2562
    %v2644 = vadd.f32 %v2231, %v2642
    %v2645 = vlaneseq
    %v2646 = vshrl.u32 %v2645, 7
    %v2647 = vsub.s32 6, %v2646
    %v2648 = vrot.slane %v124, %v2647
    %v2649 = vlaneseq
    %v2650 = vshrl.u32 %v2649, 7
    %v2651 = vsub.s32 6, %v2650
    %v2652 = vrot.slane %v125, %v2651
    %v2653 = vlaneseq
    %v2654 = vshrl.u32 %v2653, 7
    %v2655 = vsub.s32 6, %v2654
    %v2656 = vrot.slane %v126, %v2655
    %2659 = vbcast.lane.b32.xlu0 %v2656, 256
    %v2660 = vpop.permute.xlu0 %2659
    %s2662 = sor.u32 256, 8
    %2663 = vbcast.lane.b32.xlu0 %v2656, %s2662
    %v2664 = vpop.permute.xlu0 %2663
    %s2666 = sor.u32 256, 16
    %2667 = vbcast.lane.b32.xlu0 %v2656, %s2666
    %v2668 = vpop.permute.xlu0 %2667
    %s2670 = sor.u32 256, 24
    %2671 = vbcast.lane.b32.xlu0 %v2656, %s2670
    %v2672 = vpop.permute.xlu0 %2671
    %s2674 = sor.u32 256, 32
    %2675 = vbcast.lane.b32.xlu0 %v2656, %s2674
    %v2676 = vpop.permute.xlu0 %2675
    %s2678 = sor.u32 256, 40
    %2679 = vbcast.lane.b32.xlu0 %v2656, %s2678
    %v2680 = vpop.permute.xlu0 %2679
    %s2682 = sor.u32 256, 48
    %2683 = vbcast.lane.b32.xlu0 %v2656, %s2682
    %v2684 = vpop.permute.xlu0 %2683
    %s2686 = sor.u32 256, 56
    %2687 = vbcast.lane.b32.xlu0 %v2656, %s2686
    %v2688 = vpop.permute.xlu0 %2687
    %s2690 = sor.u32 256, 64
    %2691 = vbcast.lane.b32.xlu0 %v2656, %s2690
    %v2692 = vpop.permute.xlu0 %2691
    %s2694 = sor.u32 256, 72
    %2695 = vbcast.lane.b32.xlu0 %v2656, %s2694
    %v2696 = vpop.permute.xlu0 %2695
    %s2698 = sor.u32 256, 80
    %2699 = vbcast.lane.b32.xlu0 %v2656, %s2698
    %v2700 = vpop.permute.xlu0 %2699
    %s2702 = sor.u32 256, 88
    %2703 = vbcast.lane.b32.xlu0 %v2656, %s2702
    %v2704 = vpop.permute.xlu0 %2703
    %s2706 = sor.u32 256, 96
    %2707 = vbcast.lane.b32.xlu0 %v2656, %s2706
    %v2708 = vpop.permute.xlu0 %2707
    %s2710 = sor.u32 256, 104
    %2711 = vbcast.lane.b32.xlu0 %v2656, %s2710
    %v2712 = vpop.permute.xlu0 %2711
    %s2714 = sor.u32 256, 112
    %2715 = vbcast.lane.b32.xlu0 %v2656, %s2714
    %v2716 = vpop.permute.xlu0 %2715
    %s2718 = sor.u32 256, 120
    %2719 = vbcast.lane.b32.xlu0 %v2656, %s2718
    %v2720 = vpop.permute.xlu0 %2719
    %v2737 = vmul.f32 %v2648, %v2660
    %v2738 = vmul.f32 %v2648, %v2664
    %v2739 = vmul.f32 %v2648, %v2668
    %v2740 = vmul.f32 %v2648, %v2672
    %v2741 = vmul.f32 %v2648, %v2676
    %v2742 = vmul.f32 %v2648, %v2680
    %v2743 = vmul.f32 %v2648, %v2684
    %v2744 = vmul.f32 %v2648, %v2688
    %v2745 = vmul.f32 %v2648, %v2692
    %v2746 = vmul.f32 %v2648, %v2696
    %v2747 = vmul.f32 %v2648, %v2700
    %v2748 = vmul.f32 %v2648, %v2704
    %v2749 = vmul.f32 %v2648, %v2708
    %v2750 = vmul.f32 %v2648, %v2712
    %v2751 = vmul.f32 %v2648, %v2716
    %v2752 = vmul.f32 %v2648, %v2720
    %v2753 = vmul.f32 %v2652, %v2660
    %v2754 = vmul.f32 %v2652, %v2664
    %v2755 = vmul.f32 %v2652, %v2668
    %v2756 = vmul.f32 %v2652, %v2672
    %v2757 = vmul.f32 %v2652, %v2676
    %v2758 = vmul.f32 %v2652, %v2680
    %v2759 = vmul.f32 %v2652, %v2684
    %v2760 = vmul.f32 %v2652, %v2688
    %v2761 = vmul.f32 %v2652, %v2692
    %v2762 = vmul.f32 %v2652, %v2696
    %v2763 = vmul.f32 %v2652, %v2700
    %v2764 = vmul.f32 %v2652, %v2704
    %v2765 = vmul.f32 %v2652, %v2708
    %v2766 = vmul.f32 %v2652, %v2712
    %v2767 = vmul.f32 %v2652, %v2716
    %v2768 = vmul.f32 %v2652, %v2720
    %2801 = vset.pattern.permute.xlu0 0
    %2802 = vperm.xlu0 %2801, %v2737
    %v2803 = vpop.permute.xlu0 %2802
    %2804 = vset.pattern.permute.xlu0 0
    %2805 = vperm.xlu0 %2804, %v2738
    %v2806 = vpop.permute.xlu0 %2805
    %2807 = vset.pattern.permute.xlu0 0
    %2808 = vperm.xlu0 %2807, %v2739
    %v2809 = vpop.permute.xlu0 %2808
    %2810 = vset.pattern.permute.xlu0 0
    %2811 = vperm.xlu0 %2810, %v2740
    %v2812 = vpop.permute.xlu0 %2811
    %2813 = vset.pattern.permute.xlu0 0
    %2814 = vperm.xlu0 %2813, %v2741
    %v2815 = vpop.permute.xlu0 %2814
    %2816 = vset.pattern.permute.xlu0 0
    %2817 = vperm.xlu0 %2816, %v2742
    %v2818 = vpop.permute.xlu0 %2817
    %2819 = vset.pattern.permute.xlu0 0
    %2820 = vperm.xlu0 %2819, %v2743
    %v2821 = vpop.permute.xlu0 %2820
    %2822 = vset.pattern.permute.xlu0 0
    %2823 = vperm.xlu0 %2822, %v2744
    %v2824 = vpop.permute.xlu0 %2823
    %2825 = vset.pattern.permute.xlu0 0
    %2826 = vperm.xlu0 %2825, %v2745
    %v2827 = vpop.permute.xlu0 %2826
    %2828 = vset.pattern.permute.xlu0 0
    %2829 = vperm.xlu0 %2828, %v2746
    %v2830 = vpop.permute.xlu0 %2829
    %2831 = vset.pattern.permute.xlu0 0
    %2832 = vperm.xlu0 %2831, %v2747
    %v2833 = vpop.permute.xlu0 %2832
    %2834 = vset.pattern.permute.xlu0 0
    %2835 = vperm.xlu0 %2834, %v2748
    %v2836 = vpop.permute.xlu0 %2835
    %2837 = vset.pattern.permute.xlu0 0
    %2838 = vperm.xlu0 %2837, %v2749
    %v2839 = vpop.permute.xlu0 %2838
    %2840 = vset.pattern.permute.xlu0 0
    %2841 = vperm.xlu0 %2840, %v2750
    %v2842 = vpop.permute.xlu0 %2841
    %2843 = vset.pattern.permute.xlu0 0
    %2844 = vperm.xlu0 %2843, %v2751
    %v2845 = vpop.permute.xlu0 %2844
    %2846 = vset.pattern.permute.xlu0 0
    %2847 = vperm.xlu0 %2846, %v2752
    %v2848 = vpop.permute.xlu0 %2847
    %2849 = vset.pattern.permute.xlu0 0
    %2850 = vperm.xlu0 %2849, %v2753
    %v2851 = vpop.permute.xlu0 %2850
    %2852 = vset.pattern.permute.xlu0 0
    %2853 = vperm.xlu0 %2852, %v2754
    %v2854 = vpop.permute.xlu0 %2853
    %2855 = vset.pattern.permute.xlu0 0
    %2856 = vperm.xlu0 %2855, %v2755
    %v2857 = vpop.permute.xlu0 %2856
    %2858 = vset.pattern.permute.xlu0 0
    %2859 = vperm.xlu0 %2858, %v2756
    %v2860 = vpop.permute.xlu0 %2859
    %2861 = vset.pattern.permute.xlu0 0
    %2862 = vperm.xlu0 %2861, %v2757
    %v2863 = vpop.permute.xlu0 %2862
    %2864 = vset.pattern.permute.xlu0 0
    %2865 = vperm.xlu0 %2864, %v2758
    %v2866 = vpop.permute.xlu0 %2865
    %2867 = vset.pattern.permute.xlu0 0
    %2868 = vperm.xlu0 %2867, %v2759
    %v2869 = vpop.permute.xlu0 %2868
    %2870 = vset.pattern.permute.xlu0 0
    %2871 = vperm.xlu0 %2870, %v2760
    %v2872 = vpop.permute.xlu0 %2871
    %2873 = vset.pattern.permute.xlu0 0
    %2874 = vperm.xlu0 %2873, %v2761
    %v2875 = vpop.permute.xlu0 %2874
    %2876 = vset.pattern.permute.xlu0 0
    %2877 = vperm.xlu0 %2876, %v2762
    %v2878 = vpop.permute.xlu0 %2877
    %2879 = vset.pattern.permute.xlu0 0
    %2880 = vperm.xlu0 %2879, %v2763
    %v2881 = vpop.permute.xlu0 %2880
    %2882 = vset.pattern.permute.xlu0 0
    %2883 = vperm.xlu0 %2882, %v2764
    %v2884 = vpop.permute.xlu0 %2883
    %2885 = vset.pattern.permute.xlu0 0
    %2886 = vperm.xlu0 %2885, %v2765
    %v2887 = vpop.permute.xlu0 %2886
    %2888 = vset.pattern.permute.xlu0 0
    %2889 = vperm.xlu0 %2888, %v2766
    %v2890 = vpop.permute.xlu0 %2889
    %2891 = vset.pattern.permute.xlu0 0
    %2892 = vperm.xlu0 %2891, %v2767
    %v2893 = vpop.permute.xlu0 %2892
    %2894 = vset.pattern.permute.xlu0 0
    %2895 = vperm.xlu0 %2894, %v2768
    %v2896 = vpop.permute.xlu0 %2895
    %v2897 = vlaneseq
    %v2898 = vshrl.u32 %v2897, 7
    %v2899 = vsub.s32 %v387, %v2898
    %v2900 = vrot.slane %v2803, %v2899
    %v2901 = vlaneseq
    %v2902 = vshrl.u32 %v2901, 7
    %v2903 = vsub.s32 %v392, %v2902
    %v2904 = vrot.slane %v2806, %v2903
    %v2905 = vsel %vm397, %v2904, %v2900
    %v2906 = vlaneseq
    %v2907 = vshrl.u32 %v2906, 7
    %v2908 = vsub.s32 %v399, %v2907
    %v2909 = vrot.slane %v2809, %v2908
    %v2910 = vsel %vm404, %v2909, %v2905
    %v2911 = vlaneseq
    %v2912 = vshrl.u32 %v2911, 7
    %v2913 = vsub.s32 %v406, %v2912
    %v2914 = vrot.slane %v2812, %v2913
    %v2915 = vsel %vm411, %v2914, %v2910
    %v2916 = vlaneseq
    %v2917 = vshrl.u32 %v2916, 7
    %v2918 = vsub.s32 %v413, %v2917
    %v2919 = vrot.slane %v2815, %v2918
    %v2920 = vsel %vm418, %v2919, %v2915
    %v2921 = vlaneseq
    %v2922 = vshrl.u32 %v2921, 7
    %v2923 = vsub.s32 %v420, %v2922
    %v2924 = vrot.slane %v2818, %v2923
    %v2925 = vsel %vm425, %v2924, %v2920
    %v2926 = vlaneseq
    %v2927 = vshrl.u32 %v2926, 7
    %v2928 = vsub.s32 %v427, %v2927
    %v2929 = vrot.slane %v2821, %v2928
    %v2930 = vsel %vm432, %v2929, %v2925
    %v2931 = vlaneseq
    %v2932 = vshrl.u32 %v2931, 7
    %v2933 = vsub.s32 %v434, %v2932
    %v2934 = vrot.slane %v2824, %v2933
    %v2935 = vsel %vm439, %v2934, %v2930
    %v2936 = vlaneseq
    %v2937 = vshrl.u32 %v2936, 7
    %v2938 = vsub.s32 %v441, %v2937
    %v2939 = vrot.slane %v2827, %v2938
    %v2940 = vsel %vm446, %v2939, %v2935
    %v2941 = vlaneseq
    %v2942 = vshrl.u32 %v2941, 7
    %v2943 = vsub.s32 %v448, %v2942
    %v2944 = vrot.slane %v2830, %v2943
    %v2945 = vsel %vm453, %v2944, %v2940
    %v2946 = vlaneseq
    %v2947 = vshrl.u32 %v2946, 7
    %v2948 = vsub.s32 %v455, %v2947
    %v2949 = vrot.slane %v2833, %v2948
    %v2950 = vsel %vm460, %v2949, %v2945
    %v2951 = vlaneseq
    %v2952 = vshrl.u32 %v2951, 7
    %v2953 = vsub.s32 %v462, %v2952
    %v2954 = vrot.slane %v2836, %v2953
    %v2955 = vsel %vm467, %v2954, %v2950
    %v2956 = vlaneseq
    %v2957 = vshrl.u32 %v2956, 7
    %v2958 = vsub.s32 %v469, %v2957
    %v2959 = vrot.slane %v2839, %v2958
    %v2960 = vsel %vm474, %v2959, %v2955
    %v2961 = vlaneseq
    %v2962 = vshrl.u32 %v2961, 7
    %v2963 = vsub.s32 %v476, %v2962
    %v2964 = vrot.slane %v2842, %v2963
    %v2965 = vsel %vm481, %v2964, %v2960
    %v2966 = vlaneseq
    %v2967 = vshrl.u32 %v2966, 7
    %v2968 = vsub.s32 %v483, %v2967
    %v2969 = vrot.slane %v2845, %v2968
    %v2970 = vsel %vm488, %v2969, %v2965
    %v2971 = vlaneseq
    %v2972 = vshrl.u32 %v2971, 7
    %v2973 = vsub.s32 %v490, %v2972
    %v2974 = vrot.slane %v2848, %v2973
    %v2975 = vsel %vm495, %v2974, %v2970
    %v2976 = vlaneseq
    %v2977 = vshrl.u32 %v2976, 7
    %v2978 = vsub.s32 %v387, %v2977
    %v2979 = vrot.slane %v2851, %v2978
    %v2980 = vlaneseq
    %v2981 = vshrl.u32 %v2980, 7
    %v2982 = vsub.s32 %v392, %v2981
    %v2983 = vrot.slane %v2854, %v2982
    %v2984 = vsel %vm397, %v2983, %v2979
    %v2985 = vlaneseq
    %v2986 = vshrl.u32 %v2985, 7
    %v2987 = vsub.s32 %v399, %v2986
    %v2988 = vrot.slane %v2857, %v2987
    %v2989 = vsel %vm404, %v2988, %v2984
    %v2990 = vlaneseq
    %v2991 = vshrl.u32 %v2990, 7
    %v2992 = vsub.s32 %v406, %v2991
    %v2993 = vrot.slane %v2860, %v2992
    %v2994 = vsel %vm411, %v2993, %v2989
    %v2995 = vlaneseq
    %v2996 = vshrl.u32 %v2995, 7
    %v2997 = vsub.s32 %v413, %v2996
    %v2998 = vrot.slane %v2863, %v2997
    %v2999 = vsel %vm418, %v2998, %v2994
    %v3000 = vlaneseq
    %v3001 = vshrl.u32 %v3000, 7
    %v3002 = vsub.s32 %v420, %v3001
    %v3003 = vrot.slane %v2866, %v3002
    %v3004 = vsel %vm425, %v3003, %v2999
    %v3005 = vlaneseq
    %v3006 = vshrl.u32 %v3005, 7
    %v3007 = vsub.s32 %v427, %v3006
    %v3008 = vrot.slane %v2869, %v3007
    %v3009 = vsel %vm432, %v3008, %v3004
    %v3010 = vlaneseq
    %v3011 = vshrl.u32 %v3010, 7
    %v3012 = vsub.s32 %v434, %v3011
    %v3013 = vrot.slane %v2872, %v3012
    %v3014 = vsel %vm439, %v3013, %v3009
    %v3015 = vlaneseq
    %v3016 = vshrl.u32 %v3015, 7
    %v3017 = vsub.s32 %v441, %v3016
    %v3018 = vrot.slane %v2875, %v3017
    %v3019 = vsel %vm446, %v3018, %v3014
    %v3020 = vlaneseq
    %v3021 = vshrl.u32 %v3020, 7
    %v3022 = vsub.s32 %v448, %v3021
    %v3023 = vrot.slane %v2878, %v3022
    %v3024 = vsel %vm453, %v3023, %v3019
    %v3025 = vlaneseq
    %v3026 = vshrl.u32 %v3025, 7
    %v3027 = vsub.s32 %v455, %v3026
    %v3028 = vrot.slane %v2881, %v3027
    %v3029 = vsel %vm460, %v3028, %v3024
    %v3030 = vlaneseq
    %v3031 = vshrl.u32 %v3030, 7
    %v3032 = vsub.s32 %v462, %v3031
    %v3033 = vrot.slane %v2884, %v3032
    %v3034 = vsel %vm467, %v3033, %v3029
    %v3035 = vlaneseq
    %v3036 = vshrl.u32 %v3035, 7
    %v3037 = vsub.s32 %v469, %v3036
    %v3038 = vrot.slane %v2887, %v3037
    %v3039 = vsel %vm474, %v3038, %v3034
    %v3040 = vlaneseq
    %v3041 = vshrl.u32 %v3040, 7
    %v3042 = vsub.s32 %v476, %v3041
    %v3043 = vrot.slane %v2890, %v3042
    %v3044 = vsel %vm481, %v3043, %v3039
    %v3045 = vlaneseq
    %v3046 = vshrl.u32 %v3045, 7
    %v3047 = vsub.s32 %v483, %v3046
    %v3048 = vrot.slane %v2893, %v3047
    %v3049 = vsel %vm488, %v3048, %v3044
    %v3050 = vlaneseq
    %v3051 = vshrl.u32 %v3050, 7
    %v3052 = vsub.s32 %v490, %v3051
    %v3053 = vrot.slane %v2896, %v3052
    %v3054 = vsel %vm495, %v3053, %v3049
    %v3055 = vsel %vm576, %v3054, %v2975
    %v3057 = vadd.f32 %v2644, %v3055
    %v3058 = vlaneseq
    %v3059 = vshrl.u32 %v3058, 7
    %v3060 = vsub.s32 7, %v3059
    %v3061 = vrot.slane %v124, %v3060
    %v3062 = vlaneseq
    %v3063 = vshrl.u32 %v3062, 7
    %v3064 = vsub.s32 7, %v3063
    %v3065 = vrot.slane %v125, %v3064
    %v3066 = vlaneseq
    %v3067 = vshrl.u32 %v3066, 7
    %v3068 = vsub.s32 7, %v3067
    %v3069 = vrot.slane %v126, %v3068
    %3072 = vbcast.lane.b32.xlu0 %v3069, 256
    %v3073 = vpop.permute.xlu0 %3072
    %s3075 = sor.u32 256, 8
    %3076 = vbcast.lane.b32.xlu0 %v3069, %s3075
    %v3077 = vpop.permute.xlu0 %3076
    %s3079 = sor.u32 256, 16
    %3080 = vbcast.lane.b32.xlu0 %v3069, %s3079
    %v3081 = vpop.permute.xlu0 %3080
    %s3083 = sor.u32 256, 24
    %3084 = vbcast.lane.b32.xlu0 %v3069, %s3083
    %v3085 = vpop.permute.xlu0 %3084
    %s3087 = sor.u32 256, 32
    %3088 = vbcast.lane.b32.xlu0 %v3069, %s3087
    %v3089 = vpop.permute.xlu0 %3088
    %s3091 = sor.u32 256, 40
    %3092 = vbcast.lane.b32.xlu0 %v3069, %s3091
    %v3093 = vpop.permute.xlu0 %3092
    %s3095 = sor.u32 256, 48
    %3096 = vbcast.lane.b32.xlu0 %v3069, %s3095
    %v3097 = vpop.permute.xlu0 %3096
    %s3099 = sor.u32 256, 56
    %3100 = vbcast.lane.b32.xlu0 %v3069, %s3099
    %v3101 = vpop.permute.xlu0 %3100
    %s3103 = sor.u32 256, 64
    %3104 = vbcast.lane.b32.xlu0 %v3069, %s3103
    %v3105 = vpop.permute.xlu0 %3104
    %s3107 = sor.u32 256, 72
    %3108 = vbcast.lane.b32.xlu0 %v3069, %s3107
    %v3109 = vpop.permute.xlu0 %3108
    %s3111 = sor.u32 256, 80
    %3112 = vbcast.lane.b32.xlu0 %v3069, %s3111
    %v3113 = vpop.permute.xlu0 %3112
    %s3115 = sor.u32 256, 88
    %3116 = vbcast.lane.b32.xlu0 %v3069, %s3115
    %v3117 = vpop.permute.xlu0 %3116
    %s3119 = sor.u32 256, 96
    %3120 = vbcast.lane.b32.xlu0 %v3069, %s3119
    %v3121 = vpop.permute.xlu0 %3120
    %s3123 = sor.u32 256, 104
    %3124 = vbcast.lane.b32.xlu0 %v3069, %s3123
    %v3125 = vpop.permute.xlu0 %3124
    %s3127 = sor.u32 256, 112
    %3128 = vbcast.lane.b32.xlu0 %v3069, %s3127
    %v3129 = vpop.permute.xlu0 %3128
    %s3131 = sor.u32 256, 120
    %3132 = vbcast.lane.b32.xlu0 %v3069, %s3131
    %v3133 = vpop.permute.xlu0 %3132
    %v3150 = vmul.f32 %v3061, %v3073
    %v3151 = vmul.f32 %v3061, %v3077
    %v3152 = vmul.f32 %v3061, %v3081
    %v3153 = vmul.f32 %v3061, %v3085
    %v3154 = vmul.f32 %v3061, %v3089
    %v3155 = vmul.f32 %v3061, %v3093
    %v3156 = vmul.f32 %v3061, %v3097
    %v3157 = vmul.f32 %v3061, %v3101
    %v3158 = vmul.f32 %v3061, %v3105
    %v3159 = vmul.f32 %v3061, %v3109
    %v3160 = vmul.f32 %v3061, %v3113
    %v3161 = vmul.f32 %v3061, %v3117
    %v3162 = vmul.f32 %v3061, %v3121
    %v3163 = vmul.f32 %v3061, %v3125
    %v3164 = vmul.f32 %v3061, %v3129
    %v3165 = vmul.f32 %v3061, %v3133
    %v3166 = vmul.f32 %v3065, %v3073
    %v3167 = vmul.f32 %v3065, %v3077
    %v3168 = vmul.f32 %v3065, %v3081
    %v3169 = vmul.f32 %v3065, %v3085
    %v3170 = vmul.f32 %v3065, %v3089
    %v3171 = vmul.f32 %v3065, %v3093
    %v3172 = vmul.f32 %v3065, %v3097
    %v3173 = vmul.f32 %v3065, %v3101
    %v3174 = vmul.f32 %v3065, %v3105
    %v3175 = vmul.f32 %v3065, %v3109
    %v3176 = vmul.f32 %v3065, %v3113
    %v3177 = vmul.f32 %v3065, %v3117
    %v3178 = vmul.f32 %v3065, %v3121
    %v3179 = vmul.f32 %v3065, %v3125
    %v3180 = vmul.f32 %v3065, %v3129
    %v3181 = vmul.f32 %v3065, %v3133
    %3214 = vset.pattern.permute.xlu0 0
    %3215 = vperm.xlu0 %3214, %v3150
    %v3216 = vpop.permute.xlu0 %3215
    %3217 = vset.pattern.permute.xlu0 0
    %3218 = vperm.xlu0 %3217, %v3151
    %v3219 = vpop.permute.xlu0 %3218
    %3220 = vset.pattern.permute.xlu0 0
    %3221 = vperm.xlu0 %3220, %v3152
    %v3222 = vpop.permute.xlu0 %3221
    %3223 = vset.pattern.permute.xlu0 0
    %3224 = vperm.xlu0 %3223, %v3153
    %v3225 = vpop.permute.xlu0 %3224
    %3226 = vset.pattern.permute.xlu0 0
    %3227 = vperm.xlu0 %3226, %v3154
    %v3228 = vpop.permute.xlu0 %3227
    %3229 = vset.pattern.permute.xlu0 0
    %3230 = vperm.xlu0 %3229, %v3155
    %v3231 = vpop.permute.xlu0 %3230
    %3232 = vset.pattern.permute.xlu0 0
    %3233 = vperm.xlu0 %3232, %v3156
    %v3234 = vpop.permute.xlu0 %3233
    %3235 = vset.pattern.permute.xlu0 0
    %3236 = vperm.xlu0 %3235, %v3157
    %v3237 = vpop.permute.xlu0 %3236
    %3238 = vset.pattern.permute.xlu0 0
    %3239 = vperm.xlu0 %3238, %v3158
    %v3240 = vpop.permute.xlu0 %3239
    %3241 = vset.pattern.permute.xlu0 0
    %3242 = vperm.xlu0 %3241, %v3159
    %v3243 = vpop.permute.xlu0 %3242
    %3244 = vset.pattern.permute.xlu0 0
    %3245 = vperm.xlu0 %3244, %v3160
    %v3246 = vpop.permute.xlu0 %3245
    %3247 = vset.pattern.permute.xlu0 0
    %3248 = vperm.xlu0 %3247, %v3161
    %v3249 = vpop.permute.xlu0 %3248
    %3250 = vset.pattern.permute.xlu0 0
    %3251 = vperm.xlu0 %3250, %v3162
    %v3252 = vpop.permute.xlu0 %3251
    %3253 = vset.pattern.permute.xlu0 0
    %3254 = vperm.xlu0 %3253, %v3163
    %v3255 = vpop.permute.xlu0 %3254
    %3256 = vset.pattern.permute.xlu0 0
    %3257 = vperm.xlu0 %3256, %v3164
    %v3258 = vpop.permute.xlu0 %3257
    %3259 = vset.pattern.permute.xlu0 0
    %3260 = vperm.xlu0 %3259, %v3165
    %v3261 = vpop.permute.xlu0 %3260
    %3262 = vset.pattern.permute.xlu0 0
    %3263 = vperm.xlu0 %3262, %v3166
    %v3264 = vpop.permute.xlu0 %3263
    %3265 = vset.pattern.permute.xlu0 0
    %3266 = vperm.xlu0 %3265, %v3167
    %v3267 = vpop.permute.xlu0 %3266
    %3268 = vset.pattern.permute.xlu0 0
    %3269 = vperm.xlu0 %3268, %v3168
    %v3270 = vpop.permute.xlu0 %3269
    %3271 = vset.pattern.permute.xlu0 0
    %3272 = vperm.xlu0 %3271, %v3169
    %v3273 = vpop.permute.xlu0 %3272
    %3274 = vset.pattern.permute.xlu0 0
    %3275 = vperm.xlu0 %3274, %v3170
    %v3276 = vpop.permute.xlu0 %3275
    %3277 = vset.pattern.permute.xlu0 0
    %3278 = vperm.xlu0 %3277, %v3171
    %v3279 = vpop.permute.xlu0 %3278
    %3280 = vset.pattern.permute.xlu0 0
    %3281 = vperm.xlu0 %3280, %v3172
    %v3282 = vpop.permute.xlu0 %3281
    %3283 = vset.pattern.permute.xlu0 0
    %3284 = vperm.xlu0 %3283, %v3173
    %v3285 = vpop.permute.xlu0 %3284
    %3286 = vset.pattern.permute.xlu0 0
    %3287 = vperm.xlu0 %3286, %v3174
    %v3288 = vpop.permute.xlu0 %3287
    %3289 = vset.pattern.permute.xlu0 0
    %3290 = vperm.xlu0 %3289, %v3175
    %v3291 = vpop.permute.xlu0 %3290
    %3292 = vset.pattern.permute.xlu0 0
    %3293 = vperm.xlu0 %3292, %v3176
    %v3294 = vpop.permute.xlu0 %3293
    %3295 = vset.pattern.permute.xlu0 0
    %3296 = vperm.xlu0 %3295, %v3177
    %v3297 = vpop.permute.xlu0 %3296
    %3298 = vset.pattern.permute.xlu0 0
    %3299 = vperm.xlu0 %3298, %v3178
    %v3300 = vpop.permute.xlu0 %3299
    %3301 = vset.pattern.permute.xlu0 0
    %3302 = vperm.xlu0 %3301, %v3179
    %v3303 = vpop.permute.xlu0 %3302
    %3304 = vset.pattern.permute.xlu0 0
    %3305 = vperm.xlu0 %3304, %v3180
    %v3306 = vpop.permute.xlu0 %3305
    %3307 = vset.pattern.permute.xlu0 0
    %3308 = vperm.xlu0 %3307, %v3181
    %v3309 = vpop.permute.xlu0 %3308
    %v3310 = vlaneseq
    %v3311 = vshrl.u32 %v3310, 7
    %v3312 = vsub.s32 %v387, %v3311
    %v3313 = vrot.slane %v3216, %v3312
    %v3314 = vlaneseq
    %v3315 = vshrl.u32 %v3314, 7
    %v3316 = vsub.s32 %v392, %v3315
    %v3317 = vrot.slane %v3219, %v3316
    %v3318 = vsel %vm397, %v3317, %v3313
    %v3319 = vlaneseq
    %v3320 = vshrl.u32 %v3319, 7
    %v3321 = vsub.s32 %v399, %v3320
    %v3322 = vrot.slane %v3222, %v3321
    %v3323 = vsel %vm404, %v3322, %v3318
    %v3324 = vlaneseq
    %v3325 = vshrl.u32 %v3324, 7
    %v3326 = vsub.s32 %v406, %v3325
    %v3327 = vrot.slane %v3225, %v3326
    %v3328 = vsel %vm411, %v3327, %v3323
    %v3329 = vlaneseq
    %v3330 = vshrl.u32 %v3329, 7
    %v3331 = vsub.s32 %v413, %v3330
    %v3332 = vrot.slane %v3228, %v3331
    %v3333 = vsel %vm418, %v3332, %v3328
    %v3334 = vlaneseq
    %v3335 = vshrl.u32 %v3334, 7
    %v3336 = vsub.s32 %v420, %v3335
    %v3337 = vrot.slane %v3231, %v3336
    %v3338 = vsel %vm425, %v3337, %v3333
    %v3339 = vlaneseq
    %v3340 = vshrl.u32 %v3339, 7
    %v3341 = vsub.s32 %v427, %v3340
    %v3342 = vrot.slane %v3234, %v3341
    %v3343 = vsel %vm432, %v3342, %v3338
    %v3344 = vlaneseq
    %v3345 = vshrl.u32 %v3344, 7
    %v3346 = vsub.s32 %v434, %v3345
    %v3347 = vrot.slane %v3237, %v3346
    %v3348 = vsel %vm439, %v3347, %v3343
    %v3349 = vlaneseq
    %v3350 = vshrl.u32 %v3349, 7
    %v3351 = vsub.s32 %v441, %v3350
    %v3352 = vrot.slane %v3240, %v3351
    %v3353 = vsel %vm446, %v3352, %v3348
    %v3354 = vlaneseq
    %v3355 = vshrl.u32 %v3354, 7
    %v3356 = vsub.s32 %v448, %v3355
    %v3357 = vrot.slane %v3243, %v3356
    %v3358 = vsel %vm453, %v3357, %v3353
    %v3359 = vlaneseq
    %v3360 = vshrl.u32 %v3359, 7
    %v3361 = vsub.s32 %v455, %v3360
    %v3362 = vrot.slane %v3246, %v3361
    %v3363 = vsel %vm460, %v3362, %v3358
    %v3364 = vlaneseq
    %v3365 = vshrl.u32 %v3364, 7
    %v3366 = vsub.s32 %v462, %v3365
    %v3367 = vrot.slane %v3249, %v3366
    %v3368 = vsel %vm467, %v3367, %v3363
    %v3369 = vlaneseq
    %v3370 = vshrl.u32 %v3369, 7
    %v3371 = vsub.s32 %v469, %v3370
    %v3372 = vrot.slane %v3252, %v3371
    %v3373 = vsel %vm474, %v3372, %v3368
    %v3374 = vlaneseq
    %v3375 = vshrl.u32 %v3374, 7
    %v3376 = vsub.s32 %v476, %v3375
    %v3377 = vrot.slane %v3255, %v3376
    %v3378 = vsel %vm481, %v3377, %v3373
    %v3379 = vlaneseq
    %v3380 = vshrl.u32 %v3379, 7
    %v3381 = vsub.s32 %v483, %v3380
    %v3382 = vrot.slane %v3258, %v3381
    %v3383 = vsel %vm488, %v3382, %v3378
    %v3384 = vlaneseq
    %v3385 = vshrl.u32 %v3384, 7
    %v3386 = vsub.s32 %v490, %v3385
    %v3387 = vrot.slane %v3261, %v3386
    %v3388 = vsel %vm495, %v3387, %v3383
    %v3389 = vlaneseq
    %v3390 = vshrl.u32 %v3389, 7
    %v3391 = vsub.s32 %v387, %v3390
    %v3392 = vrot.slane %v3264, %v3391
    %v3393 = vlaneseq
    %v3394 = vshrl.u32 %v3393, 7
    %v3395 = vsub.s32 %v392, %v3394
    %v3396 = vrot.slane %v3267, %v3395
    %v3397 = vsel %vm397, %v3396, %v3392
    %v3398 = vlaneseq
    %v3399 = vshrl.u32 %v3398, 7
    %v3400 = vsub.s32 %v399, %v3399
    %v3401 = vrot.slane %v3270, %v3400
    %v3402 = vsel %vm404, %v3401, %v3397
    %v3403 = vlaneseq
    %v3404 = vshrl.u32 %v3403, 7
    %v3405 = vsub.s32 %v406, %v3404
    %v3406 = vrot.slane %v3273, %v3405
    %v3407 = vsel %vm411, %v3406, %v3402
    %v3408 = vlaneseq
    %v3409 = vshrl.u32 %v3408, 7
    %v3410 = vsub.s32 %v413, %v3409
    %v3411 = vrot.slane %v3276, %v3410
    %v3412 = vsel %vm418, %v3411, %v3407
    %v3413 = vlaneseq
    %v3414 = vshrl.u32 %v3413, 7
    %v3415 = vsub.s32 %v420, %v3414
    %v3416 = vrot.slane %v3279, %v3415
    %v3417 = vsel %vm425, %v3416, %v3412
    %v3418 = vlaneseq
    %v3419 = vshrl.u32 %v3418, 7
    %v3420 = vsub.s32 %v427, %v3419
    %v3421 = vrot.slane %v3282, %v3420
    %v3422 = vsel %vm432, %v3421, %v3417
    %v3423 = vlaneseq
    %v3424 = vshrl.u32 %v3423, 7
    %v3425 = vsub.s32 %v434, %v3424
    %v3426 = vrot.slane %v3285, %v3425
    %v3427 = vsel %vm439, %v3426, %v3422
    %v3428 = vlaneseq
    %v3429 = vshrl.u32 %v3428, 7
    %v3430 = vsub.s32 %v441, %v3429
    %v3431 = vrot.slane %v3288, %v3430
    %v3432 = vsel %vm446, %v3431, %v3427
    %v3433 = vlaneseq
    %v3434 = vshrl.u32 %v3433, 7
    %v3435 = vsub.s32 %v448, %v3434
    %v3436 = vrot.slane %v3291, %v3435
    %v3437 = vsel %vm453, %v3436, %v3432
    %v3438 = vlaneseq
    %v3439 = vshrl.u32 %v3438, 7
    %v3440 = vsub.s32 %v455, %v3439
    %v3441 = vrot.slane %v3294, %v3440
    %v3442 = vsel %vm460, %v3441, %v3437
    %v3443 = vlaneseq
    %v3444 = vshrl.u32 %v3443, 7
    %v3445 = vsub.s32 %v462, %v3444
    %v3446 = vrot.slane %v3297, %v3445
    %v3447 = vsel %vm467, %v3446, %v3442
    %v3448 = vlaneseq
    %v3449 = vshrl.u32 %v3448, 7
    %v3450 = vsub.s32 %v469, %v3449
    %v3451 = vrot.slane %v3300, %v3450
    %v3452 = vsel %vm474, %v3451, %v3447
    %v3453 = vlaneseq
    %v3454 = vshrl.u32 %v3453, 7
    %v3455 = vsub.s32 %v476, %v3454
    %v3456 = vrot.slane %v3303, %v3455
    %v3457 = vsel %vm481, %v3456, %v3452
    %v3458 = vlaneseq
    %v3459 = vshrl.u32 %v3458, 7
    %v3460 = vsub.s32 %v483, %v3459
    %v3461 = vrot.slane %v3306, %v3460
    %v3462 = vsel %vm488, %v3461, %v3457
    %v3463 = vlaneseq
    %v3464 = vshrl.u32 %v3463, 7
    %v3465 = vsub.s32 %v490, %v3464
    %v3466 = vrot.slane %v3309, %v3465
    %v3467 = vsel %vm495, %v3466, %v3462
    %v3468 = vsel %vm576, %v3467, %v3388
    %v3470 = vadd.f32 %v3057, %v3468
    %3471 = vst [vmem:[#allocation8] sm:$0x3] %v3470
    // Predicated region
    $region30: #{tpu_custom_call.1} parent=1 // pred_check
      _
    $region31: #{tpu_custom_call.1} parent=1 // pred_check_branch
      %3473 = sbr.rel (0) target = $region33
    $region32: #{tpu_custom_call.1} parent=1 // pred_region
      %s3475 = ssub.s32 32, 32
      %3476 = vsyncadd [#allocation4], %s3475
      %s3478 = sshll.u32 [#allocation8], 4
      %s3479 = int_to_ptr.vmem [resolvable:$true] %s3478
      %3481 = dma.vmem_to_hbm [thread:$0]  %s3479, 32, %s4, [#allocation4]
    $region33: #{tpu_custom_call.1} parent=1 // pred_fallthru
      _
    // Predicated region
    $region34: #{tpu_custom_call.1} parent=1 // pred_check
      _
    $region35: #{tpu_custom_call.1} parent=1 // pred_check_branch
      %3483 = sbr.rel (0) target = $region37
    $region36: #{tpu_custom_call.1} parent=1 // pred_region
      %3484 = dma.done [#allocation4], 32
    $region37: #{tpu_custom_call.1} parent=1 // pred_fallthru
      _
    %3485 = vsyncpa [#allocation3], 1
    %3486 = vsyncpa [#allocation6], 1
    %3487 = vsyncpa [#allocation4], 1

</llo_original>
